<compile_context>
chip_gen: v7x
topology: tpu7x:2x2x1
jax: 0.10.0
libtpu: 0.0.40
codegen_flags: <defaults>
</compile_context>

<pallas_src>
import functools

import jax
import jax.numpy as jnp
from jax.experimental import pallas as pl
from jax.experimental.pallas import tpu as pltpu

NEG_SLOPE = 0.2     # nn.LeakyReLU(negative_slope=0.2) is hardcoded in the module
BN_EPS = 1e-5


def _round_up(x, m):
    return ((x + m - 1) // m) * m


def _vmem_limit_bytes():
    """Generation-dependent VMEM limit: ~3/4 of physical, capped at 100 MiB."""
    cap = 64 * 1024 * 1024                      # conservative fallback (v7x-sized)
    try:
        cap = int(pltpu.get_tpu_info().vmem_capacity_bytes)
    except Exception:
        pass
    return max(32 * 1024 * 1024, min(cap * 3 // 4, 100 * 1024 * 1024))


def _pick_rows_tile(m_total, cp, budget_bytes):
    """Row tile for the streaming BN-apply pass (bf16 in + f32 out, double-buffered)."""
    tile = None
    for cand in (8192, 4096, 2048, 1024, 512, 256, 128, 64, 32, 16, 8):
        if cand <= m_total and 2 * cand * cp * (2 + 4) <= budget_bytes:
            tile = cand
            break
    if tile is None:
        return m_total                          # tiny problem: single full block
    # v7x has two TensorCores; make sure the 'parallel' grid has >= 2 steps.
    if -(-m_total // tile) < 2 and tile >= 16 and (tile // 2) % 8 == 0:
        tile //= 2
    return tile


def _conv_stats_kernel(x_ref, mask_ref, w_ref, y_ref, part_ref, *, ws, m_rows):
    """LeakyReLU + 4x4/s2 conv (four shifted matmuls) + per-sample BN partial sums.

    x_ref:    [1, R, 4*Cin]  bf16   (flattened 2x2 space-to-depth rows, + slack rows)
    mask_ref: [m_rows, 1]    f32    (0 on the one junk column per output row)
    w_ref:    [4, 4*Cin, Cp] bf16   (Wm[q=2i+j, (dr,dc,cin), cout])
    y_ref:    [1, m_rows, Cp] bf16
    part_ref: [1, 2, Cp]     f32    (per-sample sum(y), sum(y^2))
    """
    xin = x_ref[0]                                            # [R, 4*Cin] bf16
    xin = jnp.where(xin >= 0, xin, NEG_SLOPE * xin)           # LeakyReLU on the input tile
    # out[oh*Ws + ow] = sum_{i,j in {0,1}} xs[(oh+i)*Ws + (ow+j)] @ Wm[2i+j]
    acc = jnp.dot(xin[0:m_rows, :], w_ref[0], preferred_element_type=jnp.float32)
    for q, off in ((1, 1), (2, ws), (3, ws + 1)):
        acc = acc + jnp.dot(xin[off:off + m_rows, :], w_ref[q],
                            preferred_element_type=jnp.float32)
    # Zero the junk column (ow == Wo) so it adds nothing to the BN sums.
    yv = acc * mask_ref[...]
    y_ref[0] = yv.astype(y_ref.dtype)
    part_ref[0, 0:1, :] = jnp.sum(yv, axis=0, keepdims=True)
    part_ref[0, 1:2, :] = jnp.sum(yv * yv, axis=0, keepdims=True)


def _bn_apply_kernel(y_ref, scale_ref, shift_ref, o_ref):
    """o = y * scale + shift (per-channel affine of the batch-normalized conv output)."""
    o_ref[...] = y_ref[...].astype(jnp.float32) * scale_ref[...] + shift_ref[...]


def downsample(x, w, b, gamma, beta):
    """x: [N, Cin, H, W] NCHW f32.  w: [Cout, Cin, 4, 4].  Returns [N, Cout, H//2, W//2].

    b (conv bias) is accepted for interface fidelity but is mathematically cancelled
    by the training-mode BatchNorm that follows (batch-statistics normalization is
    shift-invariant per channel), so it is not used.
    """
    del b
    N, Cin, H, W = x.shape
    Cout = w.shape[0]
    KH = KW = 4
    S, P = 2, 1
    Ho = (H + 2 * P - KH) // S + 1
    Wo = (W + 2 * P - KW) // S + 1
    Hs, Ws = Ho + 1, Wo + 1                  # 2x2 space-to-depth grid (includes padding)
    K4 = 4 * Cin                             # s2d channels == conv contraction size
    Cp = _round_up(Cout, 128)                # lane-dense output channels
    Mrows = Ho * Ws                          # per-sample output rows (one junk col / row)
    R = Hs * Ws + 8                          # s2d rows + slack so shifted slices stay in-bounds

    vmem_limit = _vmem_limit_bytes()

    # ---- glue (single pass over x, no inflation): pad + NHWC + 2x2 space-to-depth ----
    pb = 2 * Hs - 1 - H                      # bottom pad (1 if H even, 2 if odd)
    pr = 2 * Ws - 1 - W
    xb = x.astype(jnp.bfloat16)
    xp = jnp.pad(xb, ((0, 0), (0, 0), (P, pb), (P, pr)))       # [N, Cin, 2Hs, 2Ws]
    xp = xp.transpose(0, 2, 3, 1)                               # [N, 2Hs, 2Ws, Cin]
    xs = xp.reshape(N, Hs, 2, Ws, 2, Cin).transpose(0, 1, 3, 2, 4, 5)
    xs = xs.reshape(N, Hs * Ws, K4)                             # flattened s2d rows
    xs = jnp.pad(xs, ((0, 0), (0, R - Hs * Ws), (0, 0)))        # zero slack rows

    # Weights: w[co, ci, 2i+dr, 2j+dc] -> Wm[q=2i+j, k=dr*2*Cin+dc*Cin+ci, co]
    wm = w.astype(jnp.float32).reshape(Cout, Cin, 2, 2, 2, 2)
    wm = wm.transpose(2, 4, 3, 5, 1, 0).reshape(4, K4, Cout)
    wm = jnp.pad(wm, ((0, 0), (0, 0), (0, Cp - Cout))).astype(jnp.bfloat16)

    # Valid-column mask: flattened output column ow == Wo is junk.
    mask = (jnp.arange(Mrows, dtype=jnp.int32) % Ws < Wo)
    mask = mask.astype(jnp.float32).reshape(Mrows, 1)

    cparams = pltpu.CompilerParams(dimension_semantics=("parallel",),
                                   vmem_limit_bytes=vmem_limit)

    # ---- kernel 1: fused LeakyReLU + conv + per-sample BN partial sums -------------
    kern1 = functools.partial(_conv_stats_kernel, ws=Ws, m_rows=Mrows)
    y, partials = pl.pallas_call(
        kern1,
        out_shape=(jax.ShapeDtypeStruct((N, Mrows, Cp), jnp.bfloat16),
                   jax.ShapeDtypeStruct((N, 2, Cp), jnp.float32)),
        grid=(N,),
        in_specs=[pl.BlockSpec((1, R, K4), lambda n: (n, 0, 0)),
                  pl.BlockSpec((Mrows, 1), lambda n: (0, 0)),
                  pl.BlockSpec((4, K4, Cp), lambda n: (0, 0, 0))],
        out_specs=(pl.BlockSpec((1, Mrows, Cp), lambda n: (n, 0, 0)),
                   pl.BlockSpec((1, 2, Cp), lambda n: (n, 0, 0))),
        compiler_params=cparams,
    )(xs, mask, wm)

    # ---- tiny XLA glue: reduce per-sample partials -> per-channel scale/shift -------
    cnt = N * Ho * Wo                                            # junk cols excluded by mask
    stats = jnp.sum(partials, axis=0)                            # [2, Cp]
    mean = stats[0] / cnt
    var = jnp.maximum(stats[1] / cnt - mean * mean, 0.0)         # biased var, clamped
    inv = jax.lax.rsqrt(var + BN_EPS)
    g_pad = jnp.pad(gamma.astype(jnp.float32), (0, Cp - Cout))
    be_pad = jnp.pad(beta.astype(jnp.float32), (0, Cp - Cout))
    scale = (g_pad * inv).reshape(1, Cp)
    shift = (be_pad - mean * g_pad * inv).reshape(1, Cp)

    # ---- kernel 2: streaming BN apply with its own (large) row tile ------------------
    Mtot = N * Mrows
    y2 = y.reshape(Mtot, Cp)                                     # leading-dim reshape: free
    tm2 = _pick_rows_tile(Mtot, Cp, vmem_limit // 2)
    nt2 = -(-Mtot // tm2)
    out2 = pl.pallas_call(
        _bn_apply_kernel,
        out_shape=jax.ShapeDtypeStruct((Mtot, Cp), jnp.float32),
        grid=(nt2,),
        in_specs=[pl.BlockSpec((tm2, Cp), lambda i: (i, 0)),
                  pl.BlockSpec((1, Cp), lambda i: (0, 0)),
                  pl.BlockSpec((1, Cp), lambda i: (0, 0))],
        out_specs=pl.BlockSpec((tm2, Cp), lambda i: (i, 0)),
        compiler_params=cparams,
    )(y2, scale, shift)

    # ---- single fused post-pass: drop junk column + pad channels, NHWC -> NCHW -------
    out = out2.reshape(N, Ho, Ws, Cp)[:, :, :Wo, :Cout]
    return out.transpose(0, 3, 1, 2)


def _reference(x, w, b, gamma, beta):
    """Pure-JAX f32 reference matching the PyTorch forward (training-mode BN)."""
    xa = jnp.where(x >= 0, x, NEG_SLOPE * x)
    y = jax.lax.conv_general_dilated(
        xa, w, window_strides=(2, 2), padding=((1, 1), (1, 1)),
        dimension_numbers=("NCHW", "OIHW", "NCHW"))
    y = y + b[None, :, None, None]
    mean = y.mean(axis=(0, 2, 3), keepdims=True)
    var = y.var(axis=(0, 2, 3), keepdims=True)   # biased, like BN normalization
    yn = (y - mean) / jnp.sqrt(var + BN_EPS)
    return gamma[None, :, None, None] * yn + beta[None, :, None, None]


if __name__ == "__main__":
    N, Cin, Cout, H, W = 2, 4, 8, 16, 16

    key = jax.random.PRNGKey(0)
    kx, kw, kb, kg, kbe = jax.random.split(key, 5)
    x = jax.random.normal(kx, (N, Cin, H, W), dtype=jnp.float32)
    w = jax.random.normal(kw, (Cout, Cin, 4, 4), dtype=jnp.float32) * 0.1
    b = jax.random.normal(kb, (Cout,), dtype=jnp.float32) * 0.1
    gamma = 1.0 + 0.1 * jax.random.normal(kg, (Cout,), dtype=jnp.float32)
    beta = 0.1 * jax.random.normal(kbe, (Cout,), dtype=jnp.float32)

    fwd = jax.jit(downsample)
    out = jax.block_until_ready(fwd(x, w, b, gamma, beta))

    ref = _reference(x, w, b, gamma, beta)
    assert out.shape == (N, Cout, H // 2, W // 2), out.shape
    # bf16 MXU inputs (f32 accumulation) -> looser tolerance vs. the f32 reference.
    assert jnp.allclose(out, ref, atol=5e-2, rtol=5e-2), float(jnp.abs(out - ref).max())

    print("KERNEL_OK")
</pallas_src>

<mosaic_0001>
module attributes {stable_mosaic.version = 11 : i64} {
  func.func @_conv_stats_kernel(%arg0: i32, %arg1: memref<1x89x16xbf16, #tpu.memory_space<vmem>>, %arg2: memref<72x1xf32, #tpu.memory_space<vmem>>, %arg3: memref<4x16x128xbf16, #tpu.memory_space<vmem>>, %arg4: memref<1x72x128xbf16, #tpu.memory_space<vmem>>, %arg5: memref<1x2x128xf32, #tpu.memory_space<vmem>>) attributes {dimension_semantics = [#tpu.dimension_semantics<parallel>], iteration_bounds = array<i64: 2>, scalar_prefetch = 0 : i64, scratch_operands = 0 : i64, tpu.core_type = #tpu.core_type<tc>, window_params = [{transform_indices = @transform_0, window_bounds = array<i64: 1, 89, 16>}, {pipeline_mode = #tpu.pipeline_mode<synchronous>, transform_indices = @transform_1, window_bounds = array<i64: 72, 1>}, {pipeline_mode = #tpu.pipeline_mode<synchronous>, transform_indices = @transform_2, window_bounds = array<i64: 4, 16, 128>}, {transform_indices = @transform_3, window_bounds = array<i64: 1, 72, 128>}, {transform_indices = @transform_4, window_bounds = array<i64: 1, 2, 128>}]} {
    %c0 = arith.constant 0 : index
    %c0_0 = arith.constant 0 : index
    %c0_1 = arith.constant 0 : index
    %0 = vector.load %arg1[%c0, %c0_0, %c0_1] : memref<1x89x16xbf16, #tpu.memory_space<vmem>>, vector<1x89x16xbf16>
    %1 = vector.shape_cast %0 : vector<1x89x16xbf16> to vector<89x16xbf16>
    %cst = arith.constant 0.000000e+00 : bf16
    %2 = vector.broadcast %cst : bf16 to vector<89x16xbf16>
    %3 = arith.cmpf oge, %1, %2 : vector<89x16xbf16>
    %cst_2 = arith.constant 2.001950e-01 : bf16
    %4 = vector.broadcast %cst_2 : bf16 to vector<89x16xbf16>
    %5 = arith.mulf %4, %1 : vector<89x16xbf16>
    %6 = arith.select %3, %1, %5 : vector<89x16xi1>, vector<89x16xbf16>
    %7 = vector.extract_strided_slice %6 {offsets = [0, 0], sizes = [72, 16], strides = [1, 1]} : vector<89x16xbf16> to vector<72x16xbf16>
    %c0_3 = arith.constant 0 : index
    %c0_4 = arith.constant 0 : index
    %c0_5 = arith.constant 0 : index
    %8 = vector.load %arg3[%c0_3, %c0_4, %c0_5] : memref<4x16x128xbf16, #tpu.memory_space<vmem>>, vector<1x16x128xbf16>
    %9 = vector.shape_cast %8 : vector<1x16x128xbf16> to vector<16x128xbf16>
    %cst_6 = arith.constant dense<0.000000e+00> : vector<72x128xf32>
    %10 = tpu.matmul %7, %9, %cst_6 {dimension_numbers = #tpu.dot_dimension_numbers<[1], [0], [0], [1], [0, 0, 1, 1], [], []>} : vector<72x16xbf16>, vector<16x128xbf16>, vector<72x128xf32> -> vector<72x128xf32>
    %11 = vector.extract_strided_slice %6 {offsets = [1, 0], sizes = [72, 16], strides = [1, 1]} : vector<89x16xbf16> to vector<72x16xbf16>
    %c1 = arith.constant 1 : index
    %c0_7 = arith.constant 0 : index
    %c0_8 = arith.constant 0 : index
    %12 = vector.load %arg3[%c1, %c0_7, %c0_8] : memref<4x16x128xbf16, #tpu.memory_space<vmem>>, vector<1x16x128xbf16>
    %13 = vector.shape_cast %12 : vector<1x16x128xbf16> to vector<16x128xbf16>
    %cst_9 = arith.constant dense<0.000000e+00> : vector<72x128xf32>
    %14 = tpu.matmul %11, %13, %cst_9 {dimension_numbers = #tpu.dot_dimension_numbers<[1], [0], [0], [1], [0, 0, 1, 1], [], []>} : vector<72x16xbf16>, vector<16x128xbf16>, vector<72x128xf32> -> vector<72x128xf32>
    %15 = arith.addf %10, %14 : vector<72x128xf32>
    %16 = vector.extract_strided_slice %6 {offsets = [9, 0], sizes = [72, 16], strides = [1, 1]} : vector<89x16xbf16> to vector<72x16xbf16>
    %c2 = arith.constant 2 : index
    %c0_10 = arith.constant 0 : index
    %c0_11 = arith.constant 0 : index
    %17 = vector.load %arg3[%c2, %c0_10, %c0_11] : memref<4x16x128xbf16, #tpu.memory_space<vmem>>, vector<1x16x128xbf16>
    %18 = vector.shape_cast %17 : vector<1x16x128xbf16> to vector<16x128xbf16>
    %cst_12 = arith.constant dense<0.000000e+00> : vector<72x128xf32>
    %19 = tpu.matmul %16, %18, %cst_12 {dimension_numbers = #tpu.dot_dimension_numbers<[1], [0], [0], [1], [0, 0, 1, 1], [], []>} : vector<72x16xbf16>, vector<16x128xbf16>, vector<72x128xf32> -> vector<72x128xf32>
    %20 = arith.addf %15, %19 : vector<72x128xf32>
    %21 = vector.extract_strided_slice %6 {offsets = [10, 0], sizes = [72, 16], strides = [1, 1]} : vector<89x16xbf16> to vector<72x16xbf16>
    %c3 = arith.constant 3 : index
    %c0_13 = arith.constant 0 : index
    %c0_14 = arith.constant 0 : index
    %22 = vector.load %arg3[%c3, %c0_13, %c0_14] : memref<4x16x128xbf16, #tpu.memory_space<vmem>>, vector<1x16x128xbf16>
    %23 = vector.shape_cast %22 : vector<1x16x128xbf16> to vector<16x128xbf16>
    %cst_15 = arith.constant dense<0.000000e+00> : vector<72x128xf32>
    %24 = tpu.matmul %21, %23, %cst_15 {dimension_numbers = #tpu.dot_dimension_numbers<[1], [0], [0], [1], [0, 0, 1, 1], [], []>} : vector<72x16xbf16>, vector<16x128xbf16>, vector<72x128xf32> -> vector<72x128xf32>
    %25 = arith.addf %20, %24 : vector<72x128xf32>
    %c0_16 = arith.constant 0 : index
    %c0_17 = arith.constant 0 : index
    %26 = vector.load %arg2[%c0_16, %c0_17] : memref<72x1xf32, #tpu.memory_space<vmem>>, vector<72x1xf32>
    %27 = vector.broadcast %26 : vector<72x1xf32> to vector<72x128xf32>
    %28 = arith.mulf %25, %27 : vector<72x128xf32>
    %29 = arith.truncf %28 : vector<72x128xf32> to vector<72x128xbf16>
    %c0_18 = arith.constant 0 : index
    %c0_19 = arith.constant 0 : index
    %c0_20 = arith.constant 0 : index
    %30 = vector.load %arg4[%c0_18, %c0_19, %c0_20] : memref<1x72x128xbf16, #tpu.memory_space<vmem>>, vector<1x72x128xbf16>
    %31 = vector.shape_cast %30 : vector<1x72x128xbf16> to vector<72x128xbf16>
    %32 = vector.shape_cast %29 : vector<72x128xbf16> to vector<1x72x128xbf16>
    tpu.vector_store %arg4[%c0_18, %c0_19, %c0_20], %32 {strides = array<i32>} : memref<1x72x128xbf16, #tpu.memory_space<vmem>>, vector<1x72x128xbf16>,
    %cst_21 = arith.constant dense<0.000000e+00> : vector<128xf32>
    %33 = vector.multi_reduction <add>, %28, %cst_21 [0] : vector<72x128xf32> to vector<128xf32>
    %34 = vector.shape_cast %33 : vector<128xf32> to vector<1x128xf32>
    %c0_22 = arith.constant 0 : index
    %c0_23 = arith.constant 0 : index
    %c0_24 = arith.constant 0 : index
    %35 = vector.load %arg5[%c0_22, %c0_23, %c0_24] : memref<1x2x128xf32, #tpu.memory_space<vmem>>, vector<1x1x128xf32>
    %36 = vector.shape_cast %35 : vector<1x1x128xf32> to vector<1x128xf32>
    %37 = vector.shape_cast %34 : vector<1x128xf32> to vector<1x1x128xf32>
    tpu.vector_store %arg5[%c0_22, %c0_23, %c0_24], %37 {strides = array<i32>} : memref<1x2x128xf32, #tpu.memory_space<vmem>>, vector<1x1x128xf32>,
    %38 = arith.mulf %28, %28 : vector<72x128xf32>
    %cst_25 = arith.constant dense<0.000000e+00> : vector<128xf32>
    %39 = vector.multi_reduction <add>, %38, %cst_25 [0] : vector<72x128xf32> to vector<128xf32>
    %40 = vector.shape_cast %39 : vector<128xf32> to vector<1x128xf32>
    %c0_26 = arith.constant 0 : index
    %c1_27 = arith.constant 1 : index
    %c0_28 = arith.constant 0 : index
    %41 = vector.load %arg5[%c0_26, %c1_27, %c0_28] : memref<1x2x128xf32, #tpu.memory_space<vmem>>, vector<1x1x128xf32>
    %42 = vector.shape_cast %41 : vector<1x1x128xf32> to vector<1x128xf32>
    %43 = vector.shape_cast %40 : vector<1x128xf32> to vector<1x1x128xf32>
    tpu.vector_store %arg5[%c0_26, %c1_27, %c0_28], %43 {strides = array<i32>} : memref<1x2x128xf32, #tpu.memory_space<vmem>>, vector<1x1x128xf32>,
    return
  }
  func.func @transform_0(%arg0: i32) -> (i32, i32, i32) {
    %c0_i32 = arith.constant 0 : i32
    %c0_i32_0 = arith.constant 0 : i32
    %c0_i32_1 = arith.constant 0 : i32
    return %arg0, %c0_i32, %c0_i32_0 : i32, i32, i32
  }
  func.func @transform_1(%arg0: i32) -> (i32, i32) {
    %c0_i32 = arith.constant 0 : i32
    %c0_i32_0 = arith.constant 0 : i32
    %c0_i32_1 = arith.constant 0 : i32
    return %c0_i32, %c0_i32_0 : i32, i32
  }
  func.func @transform_2(%arg0: i32) -> (i32, i32, i32) {
    %c0_i32 = arith.constant 0 : i32
    %c0_i32_0 = arith.constant 0 : i32
    %c0_i32_1 = arith.constant 0 : i32
    %c0_i32_2 = arith.constant 0 : i32
    return %c0_i32, %c0_i32_0, %c0_i32_1 : i32, i32, i32
  }
  func.func @transform_3(%arg0: i32) -> (i32, i32, i32) {
    %c0_i32 = arith.constant 0 : i32
    %c0_i32_0 = arith.constant 0 : i32
    %c0_i32_1 = arith.constant 0 : i32
    return %arg0, %c0_i32, %c0_i32_0 : i32, i32, i32
  }
  func.func @transform_4(%arg0: i32) -> (i32, i32, i32) {
    %c0_i32 = arith.constant 0 : i32
    %c0_i32_0 = arith.constant 0 : i32
    %c0_i32_1 = arith.constant 0 : i32
    return %arg0, %c0_i32, %c0_i32_0 : i32, i32, i32
  }
}

module attributes {stable_mosaic.version = 11 : i64} {
  func.func @_bn_apply_kernel(%arg0: i32, %arg1: memref<128x128xbf16, #tpu.memory_space<vmem>>, %arg2: memref<1x128xf32, #tpu.memory_space<vmem>>, %arg3: memref<1x128xf32, #tpu.memory_space<vmem>>, %arg4: memref<128x128xf32, #tpu.memory_space<vmem>>) attributes {dimension_semantics = [#tpu.dimension_semantics<parallel>], iteration_bounds = array<i64: 2>, scalar_prefetch = 0 : i64, scratch_operands = 0 : i64, tpu.core_type = #tpu.core_type<tc>, window_params = [{transform_indices = @transform_0, window_bounds = array<i64: 128, 128>}, {pipeline_mode = #tpu.pipeline_mode<synchronous>, transform_indices = @transform_1, window_bounds = array<i64: 1, 128>}, {pipeline_mode = #tpu.pipeline_mode<synchronous>, transform_indices = @transform_2, window_bounds = array<i64: 1, 128>}, {transform_indices = @transform_3, window_bounds = array<i64: 128, 128>}]} {
    %c0 = arith.constant 0 : index
    %c0_0 = arith.constant 0 : index
    %0 = vector.load %arg1[%c0, %c0_0] : memref<128x128xbf16, #tpu.memory_space<vmem>>, vector<128x128xbf16>
    %1 = arith.extf %0 : vector<128x128xbf16> to vector<128x128xf32>
    %c0_1 = arith.constant 0 : index
    %c0_2 = arith.constant 0 : index
    %2 = vector.load %arg2[%c0_1, %c0_2] : memref<1x128xf32, #tpu.memory_space<vmem>>, vector<1x128xf32>
    %3 = vector.broadcast %2 : vector<1x128xf32> to vector<128x128xf32>
    %4 = arith.mulf %1, %3 : vector<128x128xf32>
    %c0_3 = arith.constant 0 : index
    %c0_4 = arith.constant 0 : index
    %5 = vector.load %arg3[%c0_3, %c0_4] : memref<1x128xf32, #tpu.memory_space<vmem>>, vector<1x128xf32>
    %6 = vector.broadcast %5 : vector<1x128xf32> to vector<128x128xf32>
    %7 = arith.addf %4, %6 : vector<128x128xf32>
    %c0_5 = arith.constant 0 : index
    %c0_6 = arith.constant 0 : index
    %8 = vector.load %arg4[%c0_5, %c0_6] : memref<128x128xf32, #tpu.memory_space<vmem>>, vector<128x128xf32>
    tpu.vector_store %arg4[%c0_5, %c0_6], %7 {strides = array<i32>} : memref<128x128xf32, #tpu.memory_space<vmem>>, vector<128x128xf32>,
    return
  }
  func.func @transform_0(%arg0: i32) -> (i32, i32) {
    %c0_i32 = arith.constant 0 : i32
    %c0_i32_0 = arith.constant 0 : i32
    return %arg0, %c0_i32 : i32, i32
  }
  func.func @transform_1(%arg0: i32) -> (i32, i32) {
    %c0_i32 = arith.constant 0 : i32
    %c0_i32_0 = arith.constant 0 : i32
    %c0_i32_1 = arith.constant 0 : i32
    return %c0_i32, %c0_i32_0 : i32, i32
  }
  func.func @transform_2(%arg0: i32) -> (i32, i32) {
    %c0_i32 = arith.constant 0 : i32
    %c0_i32_0 = arith.constant 0 : i32
    %c0_i32_1 = arith.constant 0 : i32
    return %c0_i32, %c0_i32_0 : i32, i32
  }
  func.func @transform_3(%arg0: i32) -> (i32, i32) {
    %c0_i32 = arith.constant 0 : i32
    %c0_i32_0 = arith.constant 0 : i32
    return %arg0, %c0_i32 : i32, i32
  }
}

</mosaic_0001>

<llo_original>
// kernel: downsample.3
$region0: #{downsample.3}
  #allocation0 [shape = 'u32[]', space=smem, size = 0x4, offset = 0x4, fixed_abs, tag = 'smem constant byte address 0x4 - core index']
  #allocation1 [shape = 'u32[144,128]{1,0:T(1,128)}', space=vmem, size = 0x12000, scoped, tag = 'internal scratch']
  %s0 = inlined_call_operand.vmem [shape: bf16[144,128], index: 0, kind: input, shape index: {}]
  %s1 = inlined_call_operand.vmem [shape: f32[1,128], index: 1, kind: input, shape index: {}]
  %s2 = inlined_call_operand.vmem [shape: f32[1,128], index: 2, kind: input, shape index: {}]
  %s3 = inlined_call_operand.vmem [shape: f32[144,128], index: 3, kind: output, shape index: {}]
  %s4 = sld [smem:[#allocation0]]
  $region93: #{downsample.3} parent=0
    _
  %s6 = ssub.s32 1, %s4
  %s7 = scalar_select 0, %s6, %s4
  $region1: #{downsample.3} parent=0
    #allocation2 [shape = 'u8[131072]{0}', space=vmem, size = 0x20000, scoped, tag = 'output window, operand 0']
    loop: start=0, step=1, limit=4
    $region2: #{downsample.3} parent=1 // loop_pre_header
      _
    $region3: #{downsample.3} parent=1 // loop_header
      %s9 = sphi 0, %s13
      %p10 = scmp.ge.s32.totalorder %s9, 4
      %s19 = sphi 0, %s21
      %s22 = sphi 0, %s19
      %s23 = sphi 0, %s22
      %s39 = sphi 0, %s23
      %s43 = sphi 0, %s43
      %s45 = sphi 0, %s43
      %s46 = sphi 0, %s45
      %s60 = sphi 0, %s46
      %s64 = sphi 0, %s64
      %s66 = sphi 0, %s64
      %s67 = sphi 0, %s66
      %s81 = sphi 0, %s67
      %s87 = sphi 0, %s89
      %s90 = sphi 0, %s87
      %s91 = sphi 0, %s90
      %s107 = sphi 0, %s91
    $region4: #{downsample.3} parent=1 // loop_header_branch
      %12 = sbr.rel (%p10) target = $region8
    $region5: #{downsample.3} parent=1 // loop_body
      %s14 = ssub.s32 %s9, 1
      %s15 = ssub.s32 %s9, 2
      %s16 = sadd.s32 %s9, 1
      %s17 = ssub.s32 %s9, %s16
      %p18 = scmp.eq.s32.totalorder %s17, 0
      %s20 = sadd.s32 %s19, 1
      %s21 = scalar_select %p18, %s19, %s20
      %p24 = pneg %p18
      %p25 = scmp.eq.s32.totalorder %s9, 1
      %p26 = por %p24, %p25
      %p27 = scmp.ne.s32.totalorder %s19, %s22
      %p28 = scmp.eq.s32.totalorder %s9, 0
      %p29 = por %p27, %p28
      %p30 = scmp.ne.s32.totalorder %s19, %s22
      %p31 = scmp.eq.s32.totalorder %s14, 1
      %p32 = por %p30, %p31
      %p33 = scmp.ne.s32.totalorder %s22, %s23
      %p34 = scmp.eq.s32.totalorder %s14, 0
      %p35 = por %p33, %p34
      %p36 = scmp.ne.s32.totalorder %s22, %s23
      %p37 = scmp.eq.s32.totalorder %s15, 1
      %p38 = por %p36, %p37
      %p40 = scmp.ne.s32.totalorder %s23, %s39
      %p41 = scmp.eq.s32.totalorder %s15, 0
      %p42 = por %p40, %p41
      %s44 = sadd.s32 %s43, 1
      %p47 = scmp.eq.s32.totalorder %s9, 1
      %p48 = scmp.ne.s32.totalorder %s43, %s45
      %p49 = scmp.eq.s32.totalorder %s9, 0
      %p50 = por %p48, %p49
      %p51 = scmp.ne.s32.totalorder %s43, %s45
      %p52 = scmp.eq.s32.totalorder %s14, 1
      %p53 = por %p51, %p52
      %p54 = scmp.ne.s32.totalorder %s45, %s46
      %p55 = scmp.eq.s32.totalorder %s14, 0
      %p56 = por %p54, %p55
      %p57 = scmp.ne.s32.totalorder %s45, %s46
      %p58 = scmp.eq.s32.totalorder %s15, 1
      %p59 = por %p57, %p58
      %p61 = scmp.ne.s32.totalorder %s46, %s60
      %p62 = scmp.eq.s32.totalorder %s15, 0
      %p63 = por %p61, %p62
      %s65 = sadd.s32 %s64, 1
      %p68 = scmp.eq.s32.totalorder %s9, 1
      %p69 = scmp.ne.s32.totalorder %s64, %s66
      %p70 = scmp.eq.s32.totalorder %s9, 0
      %p71 = por %p69, %p70
      %p72 = scmp.ne.s32.totalorder %s64, %s66
      %p73 = scmp.eq.s32.totalorder %s14, 1
      %p74 = por %p72, %p73
      %p75 = scmp.ne.s32.totalorder %s66, %s67
      %p76 = scmp.eq.s32.totalorder %s14, 0
      %p77 = por %p75, %p76
      %p78 = scmp.ne.s32.totalorder %s66, %s67
      %p79 = scmp.eq.s32.totalorder %s15, 1
      %p80 = por %p78, %p79
      %p82 = scmp.ne.s32.totalorder %s67, %s81
      %p83 = scmp.eq.s32.totalorder %s15, 0
      %p84 = por %p82, %p83
      %s85 = ssub.s32 %s9, %s16
      %p86 = scmp.eq.s32.totalorder %s85, 0
      %s88 = sadd.s32 %s87, 1
      %s89 = scalar_select %p86, %s87, %s88
      %p92 = pneg %p86
      %p93 = scmp.eq.s32.totalorder %s9, 1
      %p94 = por %p92, %p93
      %p95 = scmp.ne.s32.totalorder %s87, %s90
      %p96 = scmp.eq.s32.totalorder %s9, 0
      %p97 = por %p95, %p96
      %p98 = scmp.ne.s32.totalorder %s87, %s90
      %p99 = scmp.eq.s32.totalorder %s14, 1
      %p100 = por %p98, %p99
      %p101 = scmp.ne.s32.totalorder %s90, %s91
      %p102 = scmp.eq.s32.totalorder %s14, 0
      %p103 = por %p101, %p102
      %p104 = scmp.ne.s32.totalorder %s90, %s91
      %p105 = scmp.eq.s32.totalorder %s15, 1
      %p106 = por %p104, %p105
      %p108 = scmp.ne.s32.totalorder %s91, %s107
      %p109 = scmp.eq.s32.totalorder %s15, 0
      %p110 = por %p108, %p109
      %p111 = scmp.le.s32.totalorder 1, %s9
      %p112 = scmp.lt.s32.totalorder %s9, 3
      %p113 = pnand %p111, %p112
      %p114 = pneg %p113
      // Predicated region
      $region9: #{downsample.3} parent=5 // pred_check
        _
      $region10: #{downsample.3} parent=5 // pred_check_branch
        %116 = sbr.rel (%p113) target = $region12
      $region11: #{downsample.3} parent=5 // pred_region
        %s117 = ssub.s32 %s9, 1
        // Predicated region
        $region13: #{downsample.3} parent=11 // pred_check
          %p118 = pneg %p56
        $region14: #{downsample.3} parent=11 // pred_check_branch
          %120 = sbr.rel (%p118) target = $region16
        $region15: #{downsample.3} parent=11 // pred_region
          _
        $region16: #{downsample.3} parent=11 // pred_fallthru
          _
        // Predicated region
        $region17: #{downsample.3} parent=11 // pred_check
          %p121 = pneg %p77
        $region18: #{downsample.3} parent=11 // pred_check_branch
          %123 = sbr.rel (%p121) target = $region20
        $region19: #{downsample.3} parent=11 // pred_region
          _
        $region20: #{downsample.3} parent=11 // pred_fallthru
          _
      $region12: #{downsample.3} parent=5 // pred_fallthru
        _
      %p124 = scmp.lt.s32.totalorder %s9, 2
      // Predicated region
      $region21: #{downsample.3} parent=5 // pred_check
        %p125 = pneg %p124
      $region22: #{downsample.3} parent=5 // pred_check_branch
        %127 = sbr.rel (%p125) target = $region24
      $region23: #{downsample.3} parent=5 // pred_region
        // Predicated region
        $region25: #{downsample.3} parent=23 // pred_check
          %p128 = pneg %p29
        $region26: #{downsample.3} parent=23 // pred_check_branch
          %130 = sbr.rel (%p128) target = $region28
        $region27: #{downsample.3} parent=23 // pred_region
          %s131 = smul.u32 16, %s9
          %s132 = ssub.s32 18, %s131
          %p133 = scmp.lt.s32.totalorder %s132, 16
          %s134 = scalar_select %p133, %s132, 16
          %s135 = smul.u32 64, %s134
          %p136 = scmp.lt.s32.totalorder %s131, 17
          %s137 = scalar_select %p136, %s131, 17
          %s138 = smul.addr %s137, 4
          %s139 = scalar_lea.vmem %s0, %s138
          %s140 = smul.u32 16, %s9
          %s141 = ssub.s32 18, %s140
          %p142 = scmp.lt.s32.totalorder %s141, 16
          %s143 = scalar_select %p142, %s141, 16
          %s144 = smul.u32 64, %s143
        $region28: #{downsample.3} parent=23 // pred_fallthru
          _
      $region24: #{downsample.3} parent=5 // pred_fallthru
        _
      %p145 = scmp.le.s32.totalorder 1, %s9
      %p146 = scmp.lt.s32.totalorder %s9, 3
      %p147 = pnand %p145, %p146
      %p148 = pneg %p147
      // Predicated region
      $region29: #{downsample.3} parent=5 // pred_check
        _
      $region30: #{downsample.3} parent=5 // pred_check_branch
        %150 = sbr.rel (%p147) target = $region32
      $region31: #{downsample.3} parent=5 // pred_region
        %s151 = ssub.s32 %s9, 1
        %s152 = smul.u32 16, %s14
        %s153 = ssub.s32 18, %s152
        %p154 = scmp.lt.s32.totalorder %s153, 16
        %s155 = scalar_select %p154, %s153, 16
        %s156 = smul.u32 64, %s155
        %p157 = scmp.lt.s32.totalorder %s152, 17
        %s158 = scalar_select %p157, %s152, 17
        %s159 = smul.addr %s158, 4
        %s160 = scalar_lea.vmem %s0, %s159
        %p161 = pneg %p35
        %p162 = pneg %p32
        %p163 = pneg %p56
        %p164 = pneg %p53
        %p165 = pneg %p77
        %p166 = pneg %p74
        %p167 = pneg %p103
        %p168 = pneg %p100
        %s169 = sand.u32 %s90, 1
        %s170 = sand.u32 %s90, 1
        %s171 = smul.addr %s170, 128
        %s172 = scalar_lea.vmem [#allocation2], %s171
        %s173 = smul.u32 16, %s14
        %s174 = ssub.s32 18, %s173
        %p175 = scmp.lt.s32.totalorder %s174, 16
        %s176 = scalar_select %p175, %s174, 16
        %s177 = smul.u32 64, %s176
        %p178 = scmp.lt.s32.totalorder %s173, 17
        %s179 = scalar_select %p178, %s173, 17
        %s180 = smul.addr %s179, 4
        %s181 = scalar_lea.vmem %s0, %s180
        %s182 = smul.u32 16, %s14
        %s183 = ssub.s32 18, %s182
        %p184 = scmp.lt.s32.totalorder %s183, 16
        %s185 = scalar_select %p184, %s183, 16
        %s186 = smul.u32 64, %s185
        %s187 = smul.u32 16, %s14
        %s188 = ssub.s32 18, %s187
        %p189 = scmp.lt.s32.totalorder %s188, 16
        %s190 = scalar_select %p189, %s188, 16
        %s191 = smul.u32 128, %s190
        %v192 = vld [vmem:[%s181] sm:$0xf]
        %v193 = vld [vmem:[%s181 + $0x4] sm:$0xf]
        %v194 = vld [vmem:[%s181 + $0x8] sm:$0xf]
        %v195 = vld [vmem:[%s181 + $0xc] sm:$0xf]
        %v196 = vld [vmem:[%s181 + $0x10] sm:$0xf]
        %v197 = vld [vmem:[%s181 + $0x14] sm:$0xf]
        %v198 = vld [vmem:[%s181 + $0x18] sm:$0xf]
        %v199 = vld [vmem:[%s181 + $0x1c] sm:$0xf]
        %v200 = vld [vmem:[%s181 + $0x20] sm:$0xf]
        %v201 = vld [vmem:[%s181 + $0x24] sm:$0xf]
        %v202 = vld [vmem:[%s181 + $0x28] sm:$0xf]
        %v203 = vld [vmem:[%s181 + $0x2c] sm:$0xf]
        %v204 = vld [vmem:[%s181 + $0x30] sm:$0xf]
        %v205 = vld [vmem:[%s181 + $0x34] sm:$0xf]
        %v206 = vld [vmem:[%s181 + $0x38] sm:$0xf]
        %v207 = vld [vmem:[%s181 + $0x3c] sm:$0xf]
        %v208 = vunpack.c.l.bf16 %v192
        %v209 = vunpack.c.l.bf16 %v193
        %v210 = vunpack.c.l.bf16 %v194
        %v211 = vunpack.c.l.bf16 %v195
        %v212 = vunpack.c.l.bf16 %v196
        %v213 = vunpack.c.l.bf16 %v197
        %v214 = vunpack.c.l.bf16 %v198
        %v215 = vunpack.c.l.bf16 %v199
        %v216 = vunpack.c.l.bf16 %v200
        %v217 = vunpack.c.l.bf16 %v201
        %v218 = vunpack.c.l.bf16 %v202
        %v219 = vunpack.c.l.bf16 %v203
        %v220 = vunpack.c.l.bf16 %v204
        %v221 = vunpack.c.l.bf16 %v205
        %v222 = vunpack.c.l.bf16 %v206
        %v223 = vunpack.c.l.bf16 %v207
        %v224 = vld [vmem:[%s1] sm:$0x1]
        %v226 = vlaneseq
        %v227 = vshrl.u32 %v226, 7
        %v228 = vsub.s32 0, %v227
        %v229 = vrot.slane %v224, %v228
        %v231 = vmul.f32 %v208, %v229
        %v232 = vmul.f32 %v209, %v229
        %v233 = vmul.f32 %v210, %v229
        %v234 = vmul.f32 %v211, %v229
        %v235 = vmul.f32 %v212, %v229
        %v236 = vmul.f32 %v213, %v229
        %v237 = vmul.f32 %v214, %v229
        %v238 = vmul.f32 %v215, %v229
        %v239 = vmul.f32 %v216, %v229
        %v240 = vmul.f32 %v217, %v229
        %v241 = vmul.f32 %v218, %v229
        %v242 = vmul.f32 %v219, %v229
        %v243 = vmul.f32 %v220, %v229
        %v244 = vmul.f32 %v221, %v229
        %v245 = vmul.f32 %v222, %v229
        %v246 = vmul.f32 %v223, %v229
        %v247 = vld [vmem:[%s2] sm:$0x1]
        %v249 = vlaneseq
        %v250 = vshrl.u32 %v249, 7
        %v251 = vsub.s32 0, %v250
        %v252 = vrot.slane %v247, %v251
        %v254 = vadd.f32 %v231, %v252
        %v255 = vadd.f32 %v232, %v252
        %v256 = vadd.f32 %v233, %v252
        %v257 = vadd.f32 %v234, %v252
        %v258 = vadd.f32 %v235, %v252
        %v259 = vadd.f32 %v236, %v252
        %v260 = vadd.f32 %v237, %v252
        %v261 = vadd.f32 %v238, %v252
        %v262 = vadd.f32 %v239, %v252
        %v263 = vadd.f32 %v240, %v252
        %v264 = vadd.f32 %v241, %v252
        %v265 = vadd.f32 %v242, %v252
        %v266 = vadd.f32 %v243, %v252
        %v267 = vadd.f32 %v244, %v252
        %v268 = vadd.f32 %v245, %v252
        %v269 = vadd.f32 %v246, %v252
        %270 = vst [vmem:[%s172] sm:$0xff] %v254
        %271 = vst [vmem:[%s172 + $0x8] sm:$0xff] %v255
        %272 = vst [vmem:[%s172 + $0x10] sm:$0xff] %v256
        %273 = vst [vmem:[%s172 + $0x18] sm:$0xff] %v257
        %274 = vst [vmem:[%s172 + $0x20] sm:$0xff] %v258
        %275 = vst [vmem:[%s172 + $0x28] sm:$0xff] %v259
        %276 = vst [vmem:[%s172 + $0x30] sm:$0xff] %v260
        %277 = vst [vmem:[%s172 + $0x38] sm:$0xff] %v261
        %278 = vst [vmem:[%s172 + $0x40] sm:$0xff] %v262
        %279 = vst [vmem:[%s172 + $0x48] sm:$0xff] %v263
        %280 = vst [vmem:[%s172 + $0x50] sm:$0xff] %v264
        %281 = vst [vmem:[%s172 + $0x58] sm:$0xff] %v265
        %282 = vst [vmem:[%s172 + $0x60] sm:$0xff] %v266
        %283 = vst [vmem:[%s172 + $0x68] sm:$0xff] %v267
        %284 = vst [vmem:[%s172 + $0x70] sm:$0xff] %v268
        %285 = vst [vmem:[%s172 + $0x78] sm:$0xff] %v269
        %s286 = sand.u32 %s90, 1
        %s287 = sand.u32 %s90, 1
        %s288 = smul.addr %s287, 128
        %s289 = scalar_lea.vmem [#allocation2], %s288
        // Predicated region
        $region33: #{downsample.3} parent=31 // pred_check
          %p290 = pneg %p100
        $region34: #{downsample.3} parent=31 // pred_check_branch
          %292 = sbr.rel (%p290) target = $region36
        $region35: #{downsample.3} parent=31 // pred_region
          %s293 = smul.u32 16, %s14
          %s294 = ssub.s32 18, %s293
          %p295 = scmp.lt.s32.totalorder %s294, 16
          %s296 = scalar_select %p295, %s294, 16
          %s297 = smul.u32 128, %s296
          %p298 = scmp.ne.s32.totalorder 0, %s297
          %s299 = smul.addr %s293, 8
          %s300 = scalar_lea.vmem %s3, %s299
          // Predicated region
          $region37: #{downsample.3} parent=35 // pred_check
            %p301 = pneg %p298
          $region38: #{downsample.3} parent=35 // pred_check_branch
            %303 = sbr.rel (%p301) target = $region40
          $region39: #{downsample.3} parent=35 // pred_region
            // Predicated region
            $region41: #{downsample.3} parent=39 // pred_check
              _
            $region42: #{downsample.3} parent=39 // pred_check_branch
              %305 = sbr.rel (0) target = $region44
            $region43: #{downsample.3} parent=39 // pred_region
              // Predicated region
              $region63: #{downsample.3} parent=43 // pred_check
                _
              $region64: #{downsample.3} parent=43 // pred_check_branch
                %384 = sbr.rel (0) target = $region66
              $region65: #{downsample.3} parent=43 // pred_region
                %s385 = sshrl.u32 %s296, 4
                // While loop
                $region67: #{downsample.3} parent=65 // loop_pre_header
                  _
                $region68: #{downsample.3} parent=65 // loop_header
                  %s387 = sphi 0, %s389
                  %p388 = scmp.ge.s32.totalorder %s387, %s385
                  %s392 = sphi 0, %s429
                  %s393 = sphi %s289, %s432
                  %s394 = sphi %s300, %s433
                $region69: #{downsample.3} parent=65 // loop_header_branch
                  %391 = sbr.rel (%p388) target = $region73
                $region70: #{downsample.3} parent=65 // loop_body
                  %v395 = vld [vmem:[%s393] sm:$0xff]
                  %396 = vst [vmem:[%s394] sm:$0xff] %v395
                  %v397 = vld [vmem:[%s393 + $0x8] sm:$0xff]
                  %398 = vst [vmem:[%s394 + $0x8] sm:$0xff] %v397
                  %v399 = vld [vmem:[%s393 + $0x10] sm:$0xff]
                  %400 = vst [vmem:[%s394 + $0x10] sm:$0xff] %v399
                  %v401 = vld [vmem:[%s393 + $0x18] sm:$0xff]
                  %402 = vst [vmem:[%s394 + $0x18] sm:$0xff] %v401
                  %v403 = vld [vmem:[%s393 + $0x20] sm:$0xff]
                  %404 = vst [vmem:[%s394 + $0x20] sm:$0xff] %v403
                  %v405 = vld [vmem:[%s393 + $0x28] sm:$0xff]
                  %406 = vst [vmem:[%s394 + $0x28] sm:$0xff] %v405
                  %v407 = vld [vmem:[%s393 + $0x30] sm:$0xff]
                  %408 = vst [vmem:[%s394 + $0x30] sm:$0xff] %v407
                  %v409 = vld [vmem:[%s393 + $0x38] sm:$0xff]
                  %410 = vst [vmem:[%s394 + $0x38] sm:$0xff] %v409
                  %v411 = vld [vmem:[%s393 + $0x40] sm:$0xff]
                  %412 = vst [vmem:[%s394 + $0x40] sm:$0xff] %v411
                  %v413 = vld [vmem:[%s393 + $0x48] sm:$0xff]
                  %414 = vst [vmem:[%s394 + $0x48] sm:$0xff] %v413
                  %v415 = vld [vmem:[%s393 + $0x50] sm:$0xff]
                  %416 = vst [vmem:[%s394 + $0x50] sm:$0xff] %v415
                  %v417 = vld [vmem:[%s393 + $0x58] sm:$0xff]
                  %418 = vst [vmem:[%s394 + $0x58] sm:$0xff] %v417
                  %v419 = vld [vmem:[%s393 + $0x60] sm:$0xff]
                  %420 = vst [vmem:[%s394 + $0x60] sm:$0xff] %v419
                  %v421 = vld [vmem:[%s393 + $0x68] sm:$0xff]
                  %422 = vst [vmem:[%s394 + $0x68] sm:$0xff] %v421
                  %v423 = vld [vmem:[%s393 + $0x70] sm:$0xff]
                  %424 = vst [vmem:[%s394 + $0x70] sm:$0xff] %v423
                  %v425 = vld [vmem:[%s393 + $0x78] sm:$0xff]
                  %426 = vst [vmem:[%s394 + $0x78] sm:$0xff] %v425
                  %s427 = sadd.s32 1, %s392
                  %p428 = scmp.ge.s32.totalorder %s427, %s385
                  %s429 = scalar_select %p428, 0, %s427
                  %s430 = smul.u32 %s429, 128
                  %s431 = smul.u32 %s429, 128
                  %s432 = scalar_lea.vmem %s289, %s430 [#allocation2]
                  %s433 = scalar_lea.vmem %s300, %s431
                $region71: #{downsample.3} parent=65 // loop_footer
                  %s389 = sadd.s32 %s387, 1
                $region72: #{downsample.3} parent=65 // loop_footer_branch
                  %386 = sbr.rel target = $region68
                $region73: #{downsample.3} parent=65 // loop_exit
                  _
                %s434 = sshrl.u32 %s296, 4
                %s435 = sand.u32 %s296, 15
                %s436 = smul.u32 %s434, 16
                %s437 = smul.u32 8, %s436
                %s438 = scalar_lea.vmem %s289, %s437 [#allocation2]
                %s439 = smul.u32 8, %s436
                %s440 = scalar_lea.vmem %s300, %s439
                // While loop
                $region74: #{downsample.3} parent=65 // loop_pre_header
                  _
                $region75: #{downsample.3} parent=65 // loop_header
                  %s442 = sphi 0, %s444
                  %p443 = scmp.ge.s32.totalorder %s442, %s435
                  %s447 = sphi 0, %s454
                  %s448 = sphi %s438, %s457
                  %s449 = sphi %s440, %s458
                $region76: #{downsample.3} parent=65 // loop_header_branch
                  %446 = sbr.rel (%p443) target = $region80
                $region77: #{downsample.3} parent=65 // loop_body
                  %v450 = vld [vmem:[%s448] sm:$0xff]
                  %451 = vst [vmem:[%s449] sm:$0xff] %v450
                  %s452 = sadd.s32 1, %s447
                  %p453 = scmp.ge.s32.totalorder %s452, %s435
                  %s454 = scalar_select %p453, 0, %s452
                  %s455 = smul.u32 %s454, 8
                  %s456 = smul.u32 %s454, 8
                  %s457 = scalar_lea.vmem %s438, %s455 [#allocation2]
                  %s458 = scalar_lea.vmem %s440, %s456
                $region78: #{downsample.3} parent=65 // loop_footer
                  %s444 = sadd.s32 %s442, 1
                $region79: #{downsample.3} parent=65 // loop_footer_branch
                  %441 = sbr.rel target = $region75
                $region80: #{downsample.3} parent=65 // loop_exit
                  _
              $region66: #{downsample.3} parent=43 // pred_fallthru
                _
              // Predicated region
              $region81: #{downsample.3} parent=43 // pred_check
                _
              $region82: #{downsample.3} parent=43 // pred_check_branch
                %460 = sbr.rel target = $region84
              $region83: #{downsample.3} parent=43 // pred_region
                _
              $region84: #{downsample.3} parent=43 // pred_fallthru
                _
            $region44: #{downsample.3} parent=39 // pred_fallthru
              _
            // Predicated region
            $region45: #{downsample.3} parent=39 // pred_check
              _
            $region46: #{downsample.3} parent=39 // pred_check_branch
              %307 = sbr.rel target = $region48
            $region47: #{downsample.3} parent=39 // pred_region
              %s309 = sshrl.u32 %s296, 4
              // While loop
              $region49: #{downsample.3} parent=47 // loop_pre_header
                _
              $region50: #{downsample.3} parent=47 // loop_header
                %s311 = sphi 0, %s313
                %p312 = scmp.ge.s32.totalorder %s311, %s309
                %s316 = sphi 0, %s353
                %s317 = sphi %s289, %s356
                %s318 = sphi %s300, %s357
              $region51: #{downsample.3} parent=47 // loop_header_branch
                %315 = sbr.rel (%p312) target = $region55
              $region52: #{downsample.3} parent=47 // loop_body
                %v319 = vld [vmem:[%s317] sm:$0xff]
                %320 = vst [vmem:[%s318] sm:$0xff] %v319
                %v321 = vld [vmem:[%s317 + $0x8] sm:$0xff]
                %322 = vst [vmem:[%s318 + $0x8] sm:$0xff] %v321
                %v323 = vld [vmem:[%s317 + $0x10] sm:$0xff]
                %324 = vst [vmem:[%s318 + $0x10] sm:$0xff] %v323
                %v325 = vld [vmem:[%s317 + $0x18] sm:$0xff]
                %326 = vst [vmem:[%s318 + $0x18] sm:$0xff] %v325
                %v327 = vld [vmem:[%s317 + $0x20] sm:$0xff]
                %328 = vst [vmem:[%s318 + $0x20] sm:$0xff] %v327
                %v329 = vld [vmem:[%s317 + $0x28] sm:$0xff]
                %330 = vst [vmem:[%s318 + $0x28] sm:$0xff] %v329
                %v331 = vld [vmem:[%s317 + $0x30] sm:$0xff]
                %332 = vst [vmem:[%s318 + $0x30] sm:$0xff] %v331
                %v333 = vld [vmem:[%s317 + $0x38] sm:$0xff]
                %334 = vst [vmem:[%s318 + $0x38] sm:$0xff] %v333
                %v335 = vld [vmem:[%s317 + $0x40] sm:$0xff]
                %336 = vst [vmem:[%s318 + $0x40] sm:$0xff] %v335
                %v337 = vld [vmem:[%s317 + $0x48] sm:$0xff]
                %338 = vst [vmem:[%s318 + $0x48] sm:$0xff] %v337
                %v339 = vld [vmem:[%s317 + $0x50] sm:$0xff]
                %340 = vst [vmem:[%s318 + $0x50] sm:$0xff] %v339
                %v341 = vld [vmem:[%s317 + $0x58] sm:$0xff]
                %342 = vst [vmem:[%s318 + $0x58] sm:$0xff] %v341
                %v343 = vld [vmem:[%s317 + $0x60] sm:$0xff]
                %344 = vst [vmem:[%s318 + $0x60] sm:$0xff] %v343
                %v345 = vld [vmem:[%s317 + $0x68] sm:$0xff]
                %346 = vst [vmem:[%s318 + $0x68] sm:$0xff] %v345
                %v347 = vld [vmem:[%s317 + $0x70] sm:$0xff]
                %348 = vst [vmem:[%s318 + $0x70] sm:$0xff] %v347
                %v349 = vld [vmem:[%s317 + $0x78] sm:$0xff]
                %350 = vst [vmem:[%s318 + $0x78] sm:$0xff] %v349
                %s351 = sadd.s32 1, %s316
                %p352 = scmp.ge.s32.totalorder %s351, %s309
                %s353 = scalar_select %p352, 0, %s351
                %s354 = smul.u32 %s353, 128
                %s355 = smul.u32 %s353, 128
                %s356 = scalar_lea.vmem %s289, %s354 [#allocation2]
                %s357 = scalar_lea.vmem %s300, %s355
              $region53: #{downsample.3} parent=47 // loop_footer
                %s313 = sadd.s32 %s311, 1
              $region54: #{downsample.3} parent=47 // loop_footer_branch
                %310 = sbr.rel target = $region50
              $region55: #{downsample.3} parent=47 // loop_exit
                _
              %s358 = sshrl.u32 %s296, 4
              %s359 = sand.u32 %s296, 15
              %s360 = smul.u32 %s358, 16
              %s361 = smul.u32 8, %s360
              %s362 = scalar_lea.vmem %s289, %s361 [#allocation2]
              %s363 = smul.u32 8, %s360
              %s364 = scalar_lea.vmem %s300, %s363
              // While loop
              $region56: #{downsample.3} parent=47 // loop_pre_header
                _
              $region57: #{downsample.3} parent=47 // loop_header
                %s366 = sphi 0, %s368
                %p367 = scmp.ge.s32.totalorder %s366, %s359
                %s371 = sphi 0, %s378
                %s372 = sphi %s362, %s381
                %s373 = sphi %s364, %s382
              $region58: #{downsample.3} parent=47 // loop_header_branch
                %370 = sbr.rel (%p367) target = $region62
              $region59: #{downsample.3} parent=47 // loop_body
                %v374 = vld [vmem:[%s372] sm:$0xff]
                %375 = vst [vmem:[%s373] sm:$0xff] %v374
                %s376 = sadd.s32 1, %s371
                %p377 = scmp.ge.s32.totalorder %s376, %s359
                %s378 = scalar_select %p377, 0, %s376
                %s379 = smul.u32 %s378, 8
                %s380 = smul.u32 %s378, 8
                %s381 = scalar_lea.vmem %s362, %s379 [#allocation2]
                %s382 = scalar_lea.vmem %s364, %s380
              $region60: #{downsample.3} parent=47 // loop_footer
                %s368 = sadd.s32 %s366, 1
              $region61: #{downsample.3} parent=47 // loop_footer_branch
                %365 = sbr.rel target = $region57
              $region62: #{downsample.3} parent=47 // loop_exit
                _
            $region48: #{downsample.3} parent=39 // pred_fallthru
              _
          $region40: #{downsample.3} parent=35 // pred_fallthru
            _
          %461 = vnop
        $region36: #{downsample.3} parent=31 // pred_fallthru
          _
      $region32: #{downsample.3} parent=5 // pred_fallthru
        _
      %p462 = scmp.le.s32.totalorder 2, %s9
      // Predicated region
      $region85: #{downsample.3} parent=5 // pred_check
        %p463 = pneg %p462
      $region86: #{downsample.3} parent=5 // pred_check_branch
        %465 = sbr.rel (%p463) target = $region88
      $region87: #{downsample.3} parent=5 // pred_region
        %s466 = ssub.s32 %s9, 2
        // Predicated region
        $region89: #{downsample.3} parent=87 // pred_check
          %p467 = pneg %p106
        $region90: #{downsample.3} parent=87 // pred_check_branch
          %469 = sbr.rel (%p467) target = $region92
        $region91: #{downsample.3} parent=87 // pred_region
          %s470 = sand.u32 %s91, 1
          %s471 = sand.u32 %s91, 1
          %s472 = smul.addr %s471, 128
          %s473 = scalar_lea.vmem [#allocation2], %s472
        $region92: #{downsample.3} parent=87 // pred_fallthru
          _
      $region88: #{downsample.3} parent=5 // pred_fallthru
        _
    $region6: #{downsample.3} parent=1 // loop_footer
      %s13 = sadd.s32 1, %s9
    $region7: #{downsample.3} parent=1 // loop_footer_branch
      %8 = sbr.rel target = $region3
    $region8: #{downsample.3} parent=1 // loop_exit
      _

// kernel: downsample.2
$region0: #{downsample.2}
  #allocation0 [shape = 'u32[]', space=smem, size = 0x4, offset = 0x4, fixed_abs, tag = 'smem constant byte address 0x4 - core index']
  #allocation1 [shape = 'u32[144,128]{1,0:T(1,128)}', space=vmem, size = 0x12000, scoped, tag = 'internal scratch']
  %s0 = inlined_call_operand.vmem [shape: bf16[2,89,16], index: 0, kind: input, shape index: {}]
  %s1 = inlined_call_operand.vmem [shape: f32[72,1], index: 1, kind: input, shape index: {}]
  %s2 = inlined_call_operand.vmem [shape: bf16[4,16,128], index: 2, kind: input, shape index: {}]
  %s3 = inlined_call_operand.vmem [shape: bf16[2,72,128], index: 3, kind: output, shape index: {0}]
  %s4 = inlined_call_operand.vmem [shape: f32[2,2,128], index: 4, kind: output, shape index: {1}]
  %5 = xla_tuple %s3, %s4
  %s6 = sld [smem:[#allocation0]]
  $region53: #{downsample.2} parent=0
    _
  %s8 = ssub.s32 1, %s6
  %s9 = scalar_select 0, %s8, %s6
  loop: start=0, step=1, limit=4
  $region2: #{downsample.2} parent=0 // loop_pre_header
    _
  $region3: #{downsample.2} parent=0 // loop_header
    %s11 = sphi 0, %s15
    %p12 = scmp.ge.s32.totalorder %s11, 4
    %s21 = sphi 0, %s23
    %s24 = sphi 0, %s21
    %s25 = sphi 0, %s24
    %s41 = sphi 0, %s25
    %s45 = sphi 0, %s45
    %s47 = sphi 0, %s45
    %s48 = sphi 0, %s47
    %s62 = sphi 0, %s48
    %s66 = sphi 0, %s66
    %s68 = sphi 0, %s66
    %s69 = sphi 0, %s68
    %s83 = sphi 0, %s69
    %s89 = sphi 0, %s91
    %s92 = sphi 0, %s89
    %s93 = sphi 0, %s92
    %s109 = sphi 0, %s93
    %s115 = sphi 0, %s117
    %s118 = sphi 0, %s115
    %s119 = sphi 0, %s118
    %s135 = sphi 0, %s119
  $region4: #{downsample.2} parent=0 // loop_header_branch
    %14 = sbr.rel (%p12) target = $region8
  $region5: #{downsample.2} parent=0 // loop_body
    %s16 = ssub.s32 %s11, 1
    %s17 = ssub.s32 %s11, 2
    %s18 = sadd.s32 %s11, 1
    %s19 = ssub.s32 %s11, %s18
    %p20 = scmp.eq.s32.totalorder %s19, 0
    %s22 = sadd.s32 %s21, 1
    %s23 = scalar_select %p20, %s21, %s22
    %p26 = pneg %p20
    %p27 = scmp.eq.s32.totalorder %s11, 1
    %p28 = por %p26, %p27
    %p29 = scmp.ne.s32.totalorder %s21, %s24
    %p30 = scmp.eq.s32.totalorder %s11, 0
    %p31 = por %p29, %p30
    %p32 = scmp.ne.s32.totalorder %s21, %s24
    %p33 = scmp.eq.s32.totalorder %s16, 1
    %p34 = por %p32, %p33
    %p35 = scmp.ne.s32.totalorder %s24, %s25
    %p36 = scmp.eq.s32.totalorder %s16, 0
    %p37 = por %p35, %p36
    %p38 = scmp.ne.s32.totalorder %s24, %s25
    %p39 = scmp.eq.s32.totalorder %s17, 1
    %p40 = por %p38, %p39
    %p42 = scmp.ne.s32.totalorder %s25, %s41
    %p43 = scmp.eq.s32.totalorder %s17, 0
    %p44 = por %p42, %p43
    %s46 = sadd.s32 %s45, 1
    %p49 = scmp.eq.s32.totalorder %s11, 1
    %p50 = scmp.ne.s32.totalorder %s45, %s47
    %p51 = scmp.eq.s32.totalorder %s11, 0
    %p52 = por %p50, %p51
    %p53 = scmp.ne.s32.totalorder %s45, %s47
    %p54 = scmp.eq.s32.totalorder %s16, 1
    %p55 = por %p53, %p54
    %p56 = scmp.ne.s32.totalorder %s47, %s48
    %p57 = scmp.eq.s32.totalorder %s16, 0
    %p58 = por %p56, %p57
    %p59 = scmp.ne.s32.totalorder %s47, %s48
    %p60 = scmp.eq.s32.totalorder %s17, 1
    %p61 = por %p59, %p60
    %p63 = scmp.ne.s32.totalorder %s48, %s62
    %p64 = scmp.eq.s32.totalorder %s17, 0
    %p65 = por %p63, %p64
    %s67 = sadd.s32 %s66, 1
    %p70 = scmp.eq.s32.totalorder %s11, 1
    %p71 = scmp.ne.s32.totalorder %s66, %s68
    %p72 = scmp.eq.s32.totalorder %s11, 0
    %p73 = por %p71, %p72
    %p74 = scmp.ne.s32.totalorder %s66, %s68
    %p75 = scmp.eq.s32.totalorder %s16, 1
    %p76 = por %p74, %p75
    %p77 = scmp.ne.s32.totalorder %s68, %s69
    %p78 = scmp.eq.s32.totalorder %s16, 0
    %p79 = por %p77, %p78
    %p80 = scmp.ne.s32.totalorder %s68, %s69
    %p81 = scmp.eq.s32.totalorder %s17, 1
    %p82 = por %p80, %p81
    %p84 = scmp.ne.s32.totalorder %s69, %s83
    %p85 = scmp.eq.s32.totalorder %s17, 0
    %p86 = por %p84, %p85
    %s87 = ssub.s32 %s11, %s18
    %p88 = scmp.eq.s32.totalorder %s87, 0
    %s90 = sadd.s32 %s89, 1
    %s91 = scalar_select %p88, %s89, %s90
    %p94 = pneg %p88
    %p95 = scmp.eq.s32.totalorder %s11, 1
    %p96 = por %p94, %p95
    %p97 = scmp.ne.s32.totalorder %s89, %s92
    %p98 = scmp.eq.s32.totalorder %s11, 0
    %p99 = por %p97, %p98
    %p100 = scmp.ne.s32.totalorder %s89, %s92
    %p101 = scmp.eq.s32.totalorder %s16, 1
    %p102 = por %p100, %p101
    %p103 = scmp.ne.s32.totalorder %s92, %s93
    %p104 = scmp.eq.s32.totalorder %s16, 0
    %p105 = por %p103, %p104
    %p106 = scmp.ne.s32.totalorder %s92, %s93
    %p107 = scmp.eq.s32.totalorder %s17, 1
    %p108 = por %p106, %p107
    %p110 = scmp.ne.s32.totalorder %s93, %s109
    %p111 = scmp.eq.s32.totalorder %s17, 0
    %p112 = por %p110, %p111
    %s113 = ssub.s32 %s11, %s18
    %p114 = scmp.eq.s32.totalorder %s113, 0
    %s116 = sadd.s32 %s115, 1
    %s117 = scalar_select %p114, %s115, %s116
    %p120 = pneg %p114
    %p121 = scmp.eq.s32.totalorder %s11, 1
    %p122 = por %p120, %p121
    %p123 = scmp.ne.s32.totalorder %s115, %s118
    %p124 = scmp.eq.s32.totalorder %s11, 0
    %p125 = por %p123, %p124
    %p126 = scmp.ne.s32.totalorder %s115, %s118
    %p127 = scmp.eq.s32.totalorder %s16, 1
    %p128 = por %p126, %p127
    %p129 = scmp.ne.s32.totalorder %s118, %s119
    %p130 = scmp.eq.s32.totalorder %s16, 0
    %p131 = por %p129, %p130
    %p132 = scmp.ne.s32.totalorder %s118, %s119
    %p133 = scmp.eq.s32.totalorder %s17, 1
    %p134 = por %p132, %p133
    %p136 = scmp.ne.s32.totalorder %s119, %s135
    %p137 = scmp.eq.s32.totalorder %s17, 0
    %p138 = por %p136, %p137
    %p139 = scmp.le.s32.totalorder 1, %s11
    %p140 = scmp.lt.s32.totalorder %s11, 3
    %p141 = pnand %p139, %p140
    %p142 = pneg %p141
    // Predicated region
    $region9: #{downsample.2} parent=5 // pred_check
      _
    $region10: #{downsample.2} parent=5 // pred_check_branch
      %144 = sbr.rel (%p141) target = $region12
    $region11: #{downsample.2} parent=5 // pred_region
      %s145 = ssub.s32 %s11, 1
      // Predicated region
      $region13: #{downsample.2} parent=11 // pred_check
        %p146 = pneg %p58
      $region14: #{downsample.2} parent=11 // pred_check_branch
        %148 = sbr.rel (%p146) target = $region16
      $region15: #{downsample.2} parent=11 // pred_region
        _
      $region16: #{downsample.2} parent=11 // pred_fallthru
        _
      // Predicated region
      $region17: #{downsample.2} parent=11 // pred_check
        %p149 = pneg %p79
      $region18: #{downsample.2} parent=11 // pred_check_branch
        %151 = sbr.rel (%p149) target = $region20
      $region19: #{downsample.2} parent=11 // pred_region
        _
      $region20: #{downsample.2} parent=11 // pred_fallthru
        _
    $region12: #{downsample.2} parent=5 // pred_fallthru
      _
    %p152 = scmp.lt.s32.totalorder %s11, 2
    // Predicated region
    $region21: #{downsample.2} parent=5 // pred_check
      %p153 = pneg %p152
    $region22: #{downsample.2} parent=5 // pred_check_branch
      %155 = sbr.rel (%p153) target = $region24
    $region23: #{downsample.2} parent=5 // pred_region
      // Predicated region
      $region25: #{downsample.2} parent=23 // pred_check
        %p156 = pneg %p31
      $region26: #{downsample.2} parent=23 // pred_check_branch
        %158 = sbr.rel (%p156) target = $region28
      $region27: #{downsample.2} parent=23 // pred_region
        %p159 = scmp.lt.s32.totalorder %s11, 1
        %s160 = scalar_select %p159, %s11, 1
        %s161 = smul.addr %s160, 12
        %s162 = smul.addr %s161, 4
        %s163 = scalar_lea.vmem %s0, %s162
      $region28: #{downsample.2} parent=23 // pred_fallthru
        _
    $region24: #{downsample.2} parent=5 // pred_fallthru
      _
    %p164 = scmp.le.s32.totalorder 1, %s11
    %p165 = scmp.lt.s32.totalorder %s11, 3
    %p166 = pnand %p164, %p165
    %p167 = pneg %p166
    // Predicated region
    $region29: #{downsample.2} parent=5 // pred_check
      _
    $region30: #{downsample.2} parent=5 // pred_check_branch
      %169 = sbr.rel (%p166) target = $region32
    $region31: #{downsample.2} parent=5 // pred_region
      %s170 = ssub.s32 %s11, 1
      %p171 = scmp.lt.s32.totalorder %s16, 1
      %s172 = scalar_select %p171, %s16, 1
      %s173 = smul.addr %s172, 12
      %s174 = smul.addr %s173, 4
      %s175 = scalar_lea.vmem %s0, %s174
      %p176 = pneg %p37
      %p177 = pneg %p34
      %p178 = pneg %p58
      %p179 = pneg %p55
      %p180 = pneg %p79
      %p181 = pneg %p76
      %p182 = pneg %p105
      %p183 = pneg %p102
      %p184 = scmp.lt.s32.totalorder %s16, 1
      %s185 = scalar_select %p184, %s16, 1
      %s186 = smul.addr %s185, 9
      %s187 = smul.addr %s186, 4
      %s188 = scalar_lea.vmem %s3, %s187
      %p189 = pneg %p131
      %p190 = pneg %p128
      %p191 = scmp.lt.s32.totalorder %s16, 1
      %s192 = scalar_select %p191, %s16, 1
      %s193 = smul.addr %s192, 2
      %s194 = scalar_lea.vmem %s4, %s193
      %p195 = scmp.lt.s32.totalorder %s16, 1
      %s196 = scalar_select %p195, %s16, 1
      %s197 = smul.addr %s196, 12
      %s198 = smul.addr %s197, 4
      %s199 = scalar_lea.vmem %s0, %s198
      %p200 = scmp.lt.s32.totalorder %s16, 1
      %s201 = scalar_select %p200, %s16, 1
      %s202 = smul.addr %s201, 9
      %s203 = smul.addr %s202, 4
      %s204 = scalar_lea.vmem %s3, %s203
      %p205 = scmp.lt.s32.totalorder %s16, 1
      %s206 = scalar_select %p205, %s16, 1
      %s207 = smul.addr %s206, 2
      %s208 = scalar_lea.vmem %s4, %s207
      %v211 = vld [vmem:[%s199] sm:$0xf]
      %v212 = vld [vmem:[%s199 + $0x4] sm:$0xf]
      %v213 = vld [vmem:[%s199 + $0x8] sm:$0xf]
      %v214 = vld [vmem:[%s199 + $0xc] sm:$0xf]
      %v215 = vld [vmem:[%s199 + $0x10] sm:$0xf]
      %v216 = vld [vmem:[%s199 + $0x14] sm:$0xf]
      %v217 = vld [vmem:[%s199 + $0x18] sm:$0xf]
      %v218 = vld [vmem:[%s199 + $0x1c] sm:$0xf]
      %v219 = vld [vmem:[%s199 + $0x20] sm:$0xf]
      %v220 = vld [vmem:[%s199 + $0x24] sm:$0xf]
      %v221 = vld [vmem:[%s199 + $0x28] sm:$0xf]
      %vm222 = vcmp.ge.bf16.partialorder %v211, 0
      %vm223 = vcmp.ge.bf16.partialorder %v212, 0
      %vm224 = vcmp.ge.bf16.partialorder %v213, 0
      %vm225 = vcmp.ge.bf16.partialorder %v214, 0
      %vm226 = vcmp.ge.bf16.partialorder %v215, 0
      %vm227 = vcmp.ge.bf16.partialorder %v216, 0
      %vm228 = vcmp.ge.bf16.partialorder %v217, 0
      %vm229 = vcmp.ge.bf16.partialorder %v218, 0
      %vm230 = vcmp.ge.bf16.partialorder %v219, 0
      %vm231 = vcmp.ge.bf16.partialorder %v220, 0
      %vm232 = vcmp.ge.bf16.partialorder %v221, 0
      %v233 = vmul.bf16 %v211, 1045249613
      %v234 = vmul.bf16 %v212, 1045249613
      %v235 = vmul.bf16 %v213, 1045249613
      %v236 = vmul.bf16 %v214, 1045249613
      %v237 = vmul.bf16 %v215, 1045249613
      %v238 = vmul.bf16 %v216, 1045249613
      %v239 = vmul.bf16 %v217, 1045249613
      %v240 = vmul.bf16 %v218, 1045249613
      %v241 = vmul.bf16 %v219, 1045249613
      %v242 = vmul.bf16 %v220, 1045249613
      %v243 = vmul.bf16 %v221, 1045249613
      %v244 = vsel %vm222, %v211, %v233
      %v245 = vsel %vm223, %v212, %v234
      %v246 = vsel %vm224, %v213, %v235
      %v247 = vsel %vm225, %v214, %v236
      %v248 = vsel %vm226, %v215, %v237
      %v249 = vsel %vm227, %v216, %v238
      %v250 = vsel %vm228, %v217, %v239
      %v251 = vsel %vm229, %v218, %v240
      %v252 = vsel %vm230, %v219, %v241
      %v253 = vsel %vm231, %v220, %v242
      %v254 = vsel %vm232, %v221, %v243
      %v255 = vld [vmem:[%s2] sm:$0xf]
      %v256 = vld [vmem:[%s2 + $0x4] sm:$0xf]
      %s257 = scalar_lea.vmem %s2, 8
      %v258 = vld [vmem:[%s257] sm:$0xf]
      %v259 = vld [vmem:[%s257 + $0x4] sm:$0xf]
      %v270 = vunpack.c.l.b16 %v244
      %v271 = vunpack.c.l.b16 %v245
      %v272 = vunpack.c.l.b16 %v246
      %v273 = vunpack.c.l.b16 %v247
      %v274 = vunpack.c.l.b16 %v248
      %v275 = vunpack.c.l.b16 %v249
      %v276 = vunpack.c.l.b16 %v250
      %v277 = vunpack.c.l.b16 %v251
      %v278 = vunpack.c.l.b16 %v252
      %v279 = vunpack.c.l.b16 %v253
      %v280 = vpack.c.b16 %v271, %v270
      %v281 = vpack.c.b16 %v273, %v272
      %v282 = vpack.c.b16 %v275, %v274
      %v283 = vpack.c.b16 %v277, %v276
      %v284 = vpack.c.b16 %v279, %v278
      %vm285 = vsmask.f32 7424
      %v287 = vshrl.u32 %v280, 16
      %v289 = vshll.u32 %v280, 16
      %v291 = vrot.slane %v289, 1
      %v292 = vor.u32 %v287, %v291
      %v294 = vshll.u32 %v281, 16
      %v296 = vrot.slane %v294, 1
      %v297 = vsel %vm285, %v292, %v296
      %v298 = vshrl.u32 %v281, 16
      %v300 = vor.u32 %v298, %v296
      %v302 = vshll.u32 %v282, 16
      %v304 = vrot.slane %v302, 1
      %v305 = vsel %vm285, %v300, %v304
      %v306 = vshrl.u32 %v282, 16
      %v308 = vor.u32 %v306, %v304
      %v310 = vshll.u32 %v283, 16
      %v312 = vrot.slane %v310, 1
      %v313 = vsel %vm285, %v308, %v312
      %v314 = vshrl.u32 %v283, 16
      %v316 = vor.u32 %v314, %v312
      %v318 = vshll.u32 %v284, 16
      %v320 = vrot.slane %v318, 1
      %v321 = vsel %vm285, %v316, %v320
      %v322 = vshrl.u32 %v284, 16
      %v324 = vor.u32 %v322, %v320
      %v327 = vunpack.c.l.b16 %v258
      %v328 = vunpack.c.l.b16 %v259
      %v329 = vpack.c.b16 %v328, %v327
      %vm331 = vcmask 130048
      %v333 = vsel %vm331, %v297, 0
      %v336 = vsel %vm331, %v305, 0
      %v339 = vsel %vm331, %v313, 0
      %v342 = vsel %vm331, %v321, 0
      %v345 = vsel %vm331, %v324, 0
      %347 = vmatprep.subr.bf16.mxu0 0
      %348 = vmatpush1.bf16.msra.mxu0 %v329
      %349 = vmatprep.subr.bf16.mxu0 0
      %350 = vmatpush1.bf16.msra.mxu0 0
      %351 = vmatprep.subr.bf16.mxu0 0
      %352 = vmatpush1.bf16.msra.mxu0 0
      %353 = vmatprep.subr.bf16.mxu0 0
      %354 = vmatpush1.bf16.msra.mxu0 0
      %355 = vmatprep.subr.bf16.mxu0 0
      %356 = vmatpush1.bf16.msra.mxu0 0
      %357 = vmatprep.subr.bf16.mxu0 0
      %358 = vmatpush1.bf16.msra.mxu0 0
      %359 = vmatprep.subr.bf16.mxu0 0
      %360 = vmatpush1.bf16.msra.mxu0 0
      %361 = vmatprep.subr.bf16.mxu0 0
      %362 = vmatpush1.bf16.msra.mxu0 0
      %363 = vmatprep.subr.bf16.mxu0 0
      %364 = vmatpush1.bf16.msra.mxu0 0
      %365 = vmatprep.subr.bf16.mxu0 0
      %366 = vmatpush1.bf16.msra.mxu0 0
      %367 = vmatprep.subr.bf16.mxu0 0
      %368 = vmatpush1.bf16.msra.mxu0 0
      %369 = vmatprep.subr.bf16.mxu0 0
      %370 = vmatpush1.bf16.msra.mxu0 0
      %371 = vmatprep.subr.bf16.mxu0 0
      %372 = vmatpush1.bf16.msra.mxu0 0
      %373 = vmatprep.subr.bf16.mxu0 0
      %374 = vmatpush1.bf16.msra.mxu0 0
      %375 = vmatprep.subr.bf16.mxu0 0
      %376 = vmatpush1.bf16.msra.mxu0 0
      %377 = vmatprep.subr.bf16.mxu0 0
      %378 = vmatpush1.bf16.msra.mxu0 0
      %379 = vmatprep.mubr.bf16.mxu0 0
      %380 = vmatmul.mubr.bf16.gmra.mrb[0].mxu0 %v333
      %v381 = vpop.f32.mrb[0].mxu0
      %v382 = vadd.f32 0.0, %v381
      %v383 = vpop.f32.mrb[0].mxu0
      %v384 = vpop.f32.mrb[0].mxu0
      %v385 = vadd.f32 0.0, %v384
      %v386 = vpop.f32.mrb[0].mxu0
      %387 = vmatprep.mubr.bf16.mxu0 0
      %388 = vmatmul.mubr.bf16.gmra.mrb[0].mxu0 %v336
      %v389 = vpop.f32.mrb[0].mxu0
      %v390 = vadd.f32 0.0, %v389
      %v391 = vpop.f32.mrb[0].mxu0
      %v392 = vpop.f32.mrb[0].mxu0
      %v393 = vadd.f32 0.0, %v392
      %v394 = vpop.f32.mrb[0].mxu0
      %395 = vmatprep.mubr.bf16.mxu0 0
      %396 = vmatmul.mubr.bf16.gmra.mrb[0].mxu0 %v339
      %v397 = vpop.f32.mrb[0].mxu0
      %v398 = vadd.f32 0.0, %v397
      %v399 = vpop.f32.mrb[0].mxu0
      %v400 = vpop.f32.mrb[0].mxu0
      %v401 = vadd.f32 0.0, %v400
      %v402 = vpop.f32.mrb[0].mxu0
      %403 = vmatprep.mubr.bf16.mxu0 0
      %404 = vmatmul.mubr.bf16.gmra.mrb[0].mxu0 %v342
      %v405 = vpop.f32.mrb[0].mxu0
      %v406 = vadd.f32 0.0, %v405
      %v407 = vpop.f32.mrb[0].mxu0
      %v408 = vpop.f32.mrb[0].mxu0
      %v409 = vadd.f32 0.0, %v408
      %v410 = vpop.f32.mrb[0].mxu0
      %411 = vmatprep.mubr.bf16.mxu0 0
      %412 = vmatmul.mubr.bf16.gmra.mrb[0].mxu0 %v345
      %v413 = vpop.f32.mrb[0].mxu0
      %v414 = vadd.f32 0.0, %v413
      %v415 = vpop.f32.mrb[0].mxu0
      %v416 = vpop.f32.mrb[0].mxu0
      %v417 = vpop.f32.mrb[0].mxu0
      %418 = vdwg.mxu0
      %v419 = vpack.c.b16 %v278, %v278
      %v422 = vunpack.c.l.b16 %v255
      %v423 = vunpack.c.l.b16 %v256
      %v424 = vpack.c.b16 %v423, %v422
      %v426 = vsel %vm331, %v280, 0
      %v428 = vsel %vm331, %v281, 0
      %v430 = vsel %vm331, %v282, 0
      %v432 = vsel %vm331, %v283, 0
      %v435 = vsel %vm331, %v419, 0
      %437 = vmatprep.subr.bf16.mxu0 0
      %438 = vmatpush1.bf16.msra.mxu0 %v424
      %439 = vmatprep.subr.bf16.mxu0 0
      %440 = vmatpush1.bf16.msra.mxu0 0
      %441 = vmatprep.subr.bf16.mxu0 0
      %442 = vmatpush1.bf16.msra.mxu0 0
      %443 = vmatprep.subr.bf16.mxu0 0
      %444 = vmatpush1.bf16.msra.mxu0 0
      %445 = vmatprep.subr.bf16.mxu0 0
      %446 = vmatpush1.bf16.msra.mxu0 0
      %447 = vmatprep.subr.bf16.mxu0 0
      %448 = vmatpush1.bf16.msra.mxu0 0
      %449 = vmatprep.subr.bf16.mxu0 0
      %450 = vmatpush1.bf16.msra.mxu0 0
      %451 = vmatprep.subr.bf16.mxu0 0
      %452 = vmatpush1.bf16.msra.mxu0 0
      %453 = vmatprep.subr.bf16.mxu0 0
      %454 = vmatpush1.bf16.msra.mxu0 0
      %455 = vmatprep.subr.bf16.mxu0 0
      %456 = vmatpush1.bf16.msra.mxu0 0
      %457 = vmatprep.subr.bf16.mxu0 0
      %458 = vmatpush1.bf16.msra.mxu0 0
      %459 = vmatprep.subr.bf16.mxu0 0
      %460 = vmatpush1.bf16.msra.mxu0 0
      %461 = vmatprep.subr.bf16.mxu0 0
      %462 = vmatpush1.bf16.msra.mxu0 0
      %463 = vmatprep.subr.bf16.mxu0 0
      %464 = vmatpush1.bf16.msra.mxu0 0
      %465 = vmatprep.subr.bf16.mxu0 0
      %466 = vmatpush1.bf16.msra.mxu0 0
      %467 = vmatprep.subr.bf16.mxu0 0
      %468 = vmatpush1.bf16.msra.mxu0 0
      %469 = vmatprep.mubr.bf16.mxu0 0
      %470 = vmatmul.mubr.bf16.gmra.mrb[0].mxu0 %v426
      %v471 = vpop.f32.mrb[0].mxu0
      %v472 = vadd.f32 %v382, %v471
      %v473 = vpop.f32.mrb[0].mxu0
      %v474 = vpop.f32.mrb[0].mxu0
      %v475 = vadd.f32 %v385, %v474
      %v476 = vpop.f32.mrb[0].mxu0
      %477 = vmatprep.mubr.bf16.mxu0 0
      %478 = vmatmul.mubr.bf16.gmra.mrb[0].mxu0 %v428
      %v479 = vpop.f32.mrb[0].mxu0
      %v480 = vadd.f32 %v390, %v479
      %v481 = vpop.f32.mrb[0].mxu0
      %v482 = vpop.f32.mrb[0].mxu0
      %v483 = vadd.f32 %v393, %v482
      %v484 = vpop.f32.mrb[0].mxu0
      %485 = vmatprep.mubr.bf16.mxu0 0
      %486 = vmatmul.mubr.bf16.gmra.mrb[0].mxu0 %v430
      %v487 = vpop.f32.mrb[0].mxu0
      %v488 = vadd.f32 %v398, %v487
      %v489 = vpop.f32.mrb[0].mxu0
      %v490 = vpop.f32.mrb[0].mxu0
      %v491 = vadd.f32 %v401, %v490
      %v492 = vpop.f32.mrb[0].mxu0
      %493 = vmatprep.mubr.bf16.mxu0 0
      %494 = vmatmul.mubr.bf16.gmra.mrb[0].mxu0 %v432
      %v495 = vpop.f32.mrb[0].mxu0
      %v496 = vadd.f32 %v406, %v495
      %v497 = vpop.f32.mrb[0].mxu0
      %v498 = vpop.f32.mrb[0].mxu0
      %v499 = vadd.f32 %v409, %v498
      %v500 = vpop.f32.mrb[0].mxu0
      %501 = vmatprep.mubr.bf16.mxu0 0
      %502 = vmatmul.mubr.bf16.gmra.mrb[0].mxu0 %v435
      %v503 = vpop.f32.mrb[0].mxu0
      %v504 = vadd.f32 %v414, %v503
      %v505 = vpop.f32.mrb[0].mxu0
      %v506 = vpop.f32.mrb[0].mxu0
      %v507 = vpop.f32.mrb[0].mxu0
      %508 = vdwg.mxu0
      %s509 = scalar_lea.vmem %s2, 16
      %v510 = vld [vmem:[%s509] sm:$0xf]
      %v511 = vld [vmem:[%s509 + $0x4] sm:$0xf]
      %v513 = vunpack.c.l.b16 %v254
      %v514 = vpack.c.b16 %v272, %v271
      %v515 = vpack.c.b16 %v274, %v273
      %v516 = vpack.c.b16 %v276, %v275
      %v517 = vpack.c.b16 %v278, %v277
      %v518 = vpack.c.b16 %v513, %v279
      %v520 = vshrl.u32 %v514, 16
      %v522 = vshll.u32 %v514, 16
      %v524 = vrot.slane %v522, 1
      %v525 = vor.u32 %v520, %v524
      %v527 = vshll.u32 %v515, 16
      %v529 = vrot.slane %v527, 1
      %v530 = vsel %vm285, %v525, %v529
      %v531 = vshrl.u32 %v515, 16
      %v533 = vor.u32 %v531, %v529
      %v535 = vshll.u32 %v516, 16
      %v537 = vrot.slane %v535, 1
      %v538 = vsel %vm285, %v533, %v537
      %v539 = vshrl.u32 %v516, 16
      %v541 = vor.u32 %v539, %v537
      %v543 = vshll.u32 %v517, 16
      %v545 = vrot.slane %v543, 1
      %v546 = vsel %vm285, %v541, %v545
      %v547 = vshrl.u32 %v517, 16
      %v549 = vor.u32 %v547, %v545
      %v551 = vshll.u32 %v518, 16
      %v553 = vrot.slane %v551, 1
      %v554 = vsel %vm285, %v549, %v553
      %v555 = vshrl.u32 %v518, 16
      %v557 = vor.u32 %v555, %v553
      %v560 = vunpack.c.l.b16 %v510
      %v561 = vunpack.c.l.b16 %v511
      %v562 = vpack.c.b16 %v561, %v560
      %v565 = vsel %vm331, %v530, 0
      %v568 = vsel %vm331, %v538, 0
      %v571 = vsel %vm331, %v546, 0
      %v574 = vsel %vm331, %v554, 0
      %v577 = vsel %vm331, %v557, 0
      %579 = vmatprep.subr.bf16.mxu0 0
      %580 = vmatpush1.bf16.msra.mxu0 %v562
      %581 = vmatprep.subr.bf16.mxu0 0
      %582 = vmatpush1.bf16.msra.mxu0 0
      %583 = vmatprep.subr.bf16.mxu0 0
      %584 = vmatpush1.bf16.msra.mxu0 0
      %585 = vmatprep.subr.bf16.mxu0 0
      %586 = vmatpush1.bf16.msra.mxu0 0
      %587 = vmatprep.subr.bf16.mxu0 0
      %588 = vmatpush1.bf16.msra.mxu0 0
      %589 = vmatprep.subr.bf16.mxu0 0
      %590 = vmatpush1.bf16.msra.mxu0 0
      %591 = vmatprep.subr.bf16.mxu0 0
      %592 = vmatpush1.bf16.msra.mxu0 0
      %593 = vmatprep.subr.bf16.mxu0 0
      %594 = vmatpush1.bf16.msra.mxu0 0
      %595 = vmatprep.subr.bf16.mxu0 0
      %596 = vmatpush1.bf16.msra.mxu0 0
      %597 = vmatprep.subr.bf16.mxu0 0
      %598 = vmatpush1.bf16.msra.mxu0 0
      %599 = vmatprep.subr.bf16.mxu0 0
      %600 = vmatpush1.bf16.msra.mxu0 0
      %601 = vmatprep.subr.bf16.mxu0 0
      %602 = vmatpush1.bf16.msra.mxu0 0
      %603 = vmatprep.subr.bf16.mxu0 0
      %604 = vmatpush1.bf16.msra.mxu0 0
      %605 = vmatprep.subr.bf16.mxu0 0
      %606 = vmatpush1.bf16.msra.mxu0 0
      %607 = vmatprep.subr.bf16.mxu0 0
      %608 = vmatpush1.bf16.msra.mxu0 0
      %609 = vmatprep.subr.bf16.mxu0 0
      %610 = vmatpush1.bf16.msra.mxu0 0
      %611 = vmatprep.mubr.bf16.mxu0 0
      %612 = vmatmul.mubr.bf16.gmra.mrb[0].mxu0 %v565
      %v613 = vpop.f32.mrb[0].mxu0
      %v614 = vadd.f32 0.0, %v613
      %v615 = vpop.f32.mrb[0].mxu0
      %v616 = vpop.f32.mrb[0].mxu0
      %v617 = vadd.f32 0.0, %v616
      %v618 = vpop.f32.mrb[0].mxu0
      %619 = vmatprep.mubr.bf16.mxu0 0
      %620 = vmatmul.mubr.bf16.gmra.mrb[0].mxu0 %v568
      %v621 = vpop.f32.mrb[0].mxu0
      %v622 = vadd.f32 0.0, %v621
      %v623 = vpop.f32.mrb[0].mxu0
      %v624 = vpop.f32.mrb[0].mxu0
      %v625 = vadd.f32 0.0, %v624
      %v626 = vpop.f32.mrb[0].mxu0
      %627 = vmatprep.mubr.bf16.mxu0 0
      %628 = vmatmul.mubr.bf16.gmra.mrb[0].mxu0 %v571
      %v629 = vpop.f32.mrb[0].mxu0
      %v630 = vadd.f32 0.0, %v629
      %v631 = vpop.f32.mrb[0].mxu0
      %v632 = vpop.f32.mrb[0].mxu0
      %v633 = vadd.f32 0.0, %v632
      %v634 = vpop.f32.mrb[0].mxu0
      %635 = vmatprep.mubr.bf16.mxu0 0
      %636 = vmatmul.mubr.bf16.gmra.mrb[0].mxu0 %v574
      %v637 = vpop.f32.mrb[0].mxu0
      %v638 = vadd.f32 0.0, %v637
      %v639 = vpop.f32.mrb[0].mxu0
      %v640 = vpop.f32.mrb[0].mxu0
      %v641 = vadd.f32 0.0, %v640
      %v642 = vpop.f32.mrb[0].mxu0
      %643 = vmatprep.mubr.bf16.mxu0 0
      %644 = vmatmul.mubr.bf16.gmra.mrb[0].mxu0 %v577
      %v645 = vpop.f32.mrb[0].mxu0
      %v646 = vadd.f32 0.0, %v645
      %v647 = vpop.f32.mrb[0].mxu0
      %v648 = vpop.f32.mrb[0].mxu0
      %v649 = vpop.f32.mrb[0].mxu0
      %650 = vdwg.mxu0
      %v651 = vadd.f32 %v472, %v614
      %v652 = vadd.f32 %v475, %v617
      %v653 = vadd.f32 %v480, %v622
      %v654 = vadd.f32 %v483, %v625
      %v655 = vadd.f32 %v488, %v630
      %v656 = vadd.f32 %v491, %v633
      %v657 = vadd.f32 %v496, %v638
      %v658 = vadd.f32 %v499, %v641
      %v659 = vadd.f32 %v504, %v646
      %s660 = scalar_lea.vmem %s2, 24
      %v661 = vld [vmem:[%s660] sm:$0xf]
      %v662 = vld [vmem:[%s660 + $0x4] sm:$0xf]
      %vm663 = vcmask 1046528
      %v664 = vrot.slane %v514, 1
      %v665 = vrot.slane %v515, 1
      %v666 = vsel %vm663, %v664, %v665
      %v667 = vrot.slane %v516, 1
      %v668 = vsel %vm663, %v665, %v667
      %v669 = vrot.slane %v517, 1
      %v670 = vsel %vm663, %v667, %v669
      %v671 = vrot.slane %v518, 1
      %v672 = vsel %vm663, %v669, %v671
      %v675 = vunpack.c.l.b16 %v661
      %v676 = vunpack.c.l.b16 %v662
      %v677 = vpack.c.b16 %v676, %v675
      %v680 = vsel %vm331, %v666, 0
      %v683 = vsel %vm331, %v668, 0
      %v686 = vsel %vm331, %v670, 0
      %v689 = vsel %vm331, %v672, 0
      %v692 = vsel %vm331, %v671, 0
      %694 = vmatprep.subr.bf16.mxu0 0
      %695 = vmatpush1.bf16.msra.mxu0 %v677
      %696 = vmatprep.subr.bf16.mxu0 0
      %697 = vmatpush1.bf16.msra.mxu0 0
      %698 = vmatprep.subr.bf16.mxu0 0
      %699 = vmatpush1.bf16.msra.mxu0 0
      %700 = vmatprep.subr.bf16.mxu0 0
      %701 = vmatpush1.bf16.msra.mxu0 0
      %702 = vmatprep.subr.bf16.mxu0 0
      %703 = vmatpush1.bf16.msra.mxu0 0
      %704 = vmatprep.subr.bf16.mxu0 0
      %705 = vmatpush1.bf16.msra.mxu0 0
      %706 = vmatprep.subr.bf16.mxu0 0
      %707 = vmatpush1.bf16.msra.mxu0 0
      %708 = vmatprep.subr.bf16.mxu0 0
      %709 = vmatpush1.bf16.msra.mxu0 0
      %710 = vmatprep.subr.bf16.mxu0 0
      %711 = vmatpush1.bf16.msra.mxu0 0
      %712 = vmatprep.subr.bf16.mxu0 0
      %713 = vmatpush1.bf16.msra.mxu0 0
      %714 = vmatprep.subr.bf16.mxu0 0
      %715 = vmatpush1.bf16.msra.mxu0 0
      %716 = vmatprep.subr.bf16.mxu0 0
      %717 = vmatpush1.bf16.msra.mxu0 0
      %718 = vmatprep.subr.bf16.mxu0 0
      %719 = vmatpush1.bf16.msra.mxu0 0
      %720 = vmatprep.subr.bf16.mxu0 0
      %721 = vmatpush1.bf16.msra.mxu0 0
      %722 = vmatprep.subr.bf16.mxu0 0
      %723 = vmatpush1.bf16.msra.mxu0 0
      %724 = vmatprep.subr.bf16.mxu0 0
      %725 = vmatpush1.bf16.msra.mxu0 0
      %726 = vmatprep.mubr.bf16.mxu0 0
      %727 = vmatmul.mubr.bf16.gmra.mrb[0].mxu0 %v680
      %v728 = vpop.f32.mrb[0].mxu0
      %v729 = vadd.f32 0.0, %v728
      %v730 = vpop.f32.mrb[0].mxu0
      %v731 = vpop.f32.mrb[0].mxu0
      %v732 = vadd.f32 0.0, %v731
      %v733 = vpop.f32.mrb[0].mxu0
      %734 = vmatprep.mubr.bf16.mxu0 0
      %735 = vmatmul.mubr.bf16.gmra.mrb[0].mxu0 %v683
      %v736 = vpop.f32.mrb[0].mxu0
      %v737 = vadd.f32 0.0, %v736
      %v738 = vpop.f32.mrb[0].mxu0
      %v739 = vpop.f32.mrb[0].mxu0
      %v740 = vadd.f32 0.0, %v739
      %v741 = vpop.f32.mrb[0].mxu0
      %742 = vmatprep.mubr.bf16.mxu0 0
      %743 = vmatmul.mubr.bf16.gmra.mrb[0].mxu0 %v686
      %v744 = vpop.f32.mrb[0].mxu0
      %v745 = vadd.f32 0.0, %v744
      %v746 = vpop.f32.mrb[0].mxu0
      %v747 = vpop.f32.mrb[0].mxu0
      %v748 = vadd.f32 0.0, %v747
      %v749 = vpop.f32.mrb[0].mxu0
      %750 = vmatprep.mubr.bf16.mxu0 0
      %751 = vmatmul.mubr.bf16.gmra.mrb[0].mxu0 %v689
      %v752 = vpop.f32.mrb[0].mxu0
      %v753 = vadd.f32 0.0, %v752
      %v754 = vpop.f32.mrb[0].mxu0
      %v755 = vpop.f32.mrb[0].mxu0
      %v756 = vadd.f32 0.0, %v755
      %v757 = vpop.f32.mrb[0].mxu0
      %758 = vmatprep.mubr.bf16.mxu0 0
      %759 = vmatmul.mubr.bf16.gmra.mrb[0].mxu0 %v692
      %v760 = vpop.f32.mrb[0].mxu0
      %v761 = vadd.f32 0.0, %v760
      %v762 = vpop.f32.mrb[0].mxu0
      %v763 = vpop.f32.mrb[0].mxu0
      %v764 = vpop.f32.mrb[0].mxu0
      %765 = vdwg.mxu0
      %v766 = vadd.f32 %v651, %v729
      %v767 = vadd.f32 %v652, %v732
      %v768 = vadd.f32 %v653, %v737
      %v769 = vadd.f32 %v654, %v740
      %v770 = vadd.f32 %v655, %v745
      %v771 = vadd.f32 %v656, %v748
      %v772 = vadd.f32 %v657, %v753
      %v773 = vadd.f32 %v658, %v756
      %v774 = vadd.f32 %v659, %v761
      %v775 = vld [vmem:[%s1] sm:$0xff]
      %v776 = vld [vmem:[%s1 + $0x8] sm:$0xff]
      %v777 = vld [vmem:[%s1 + $0x10] sm:$0xff]
      %v778 = vld [vmem:[%s1 + $0x18] sm:$0xff]
      %v779 = vld [vmem:[%s1 + $0x20] sm:$0xff]
      %v780 = vld [vmem:[%s1 + $0x28] sm:$0xff]
      %v781 = vld [vmem:[%s1 + $0x30] sm:$0xff]
      %v782 = vld [vmem:[%s1 + $0x38] sm:$0xff]
      %v783 = vld [vmem:[%s1 + $0x40] sm:$0xff]
      %785 = vset.pattern.permute.xlu0 0
      %786 = vperm.xlu0 %785, %v775
      %v787 = vpop.permute.xlu0 %786
      %790 = vset.pattern.permute.xlu0 0
      %791 = vperm.xlu0 %790, %v776
      %v792 = vpop.permute.xlu0 %791
      %795 = vset.pattern.permute.xlu0 0
      %796 = vperm.xlu0 %795, %v777
      %v797 = vpop.permute.xlu0 %796
      %800 = vset.pattern.permute.xlu0 0
      %801 = vperm.xlu0 %800, %v778
      %v802 = vpop.permute.xlu0 %801
      %805 = vset.pattern.permute.xlu0 0
      %806 = vperm.xlu0 %805, %v779
      %v807 = vpop.permute.xlu0 %806
      %810 = vset.pattern.permute.xlu0 0
      %811 = vperm.xlu0 %810, %v780
      %v812 = vpop.permute.xlu0 %811
      %815 = vset.pattern.permute.xlu0 0
      %816 = vperm.xlu0 %815, %v781
      %v817 = vpop.permute.xlu0 %816
      %820 = vset.pattern.permute.xlu0 0
      %821 = vperm.xlu0 %820, %v782
      %v822 = vpop.permute.xlu0 %821
      %825 = vset.pattern.permute.xlu0 0
      %826 = vperm.xlu0 %825, %v783
      %v827 = vpop.permute.xlu0 %826
      %v829 = vmul.f32 %v766, %v787
      %v830 = vmul.f32 %v767, %v792
      %v831 = vmul.f32 %v768, %v797
      %v832 = vmul.f32 %v769, %v802
      %v833 = vmul.f32 %v770, %v807
      %v834 = vmul.f32 %v771, %v812
      %v835 = vmul.f32 %v772, %v817
      %v836 = vmul.f32 %v773, %v822
      %v837 = vmul.f32 %v774, %v827
      %v838 = vpack.c.bf16 %v830, %v829
      %v839 = vpack.c.bf16 %v832, %v831
      %v840 = vpack.c.bf16 %v834, %v833
      %v841 = vpack.c.bf16 %v836, %v835
      %v842 = vpack.c.bf16 %v837, %v837
      %v848 = vunpack.c.l.b16 %v838
      %v849 = vunpack.c.h.b16 %v838
      %v850 = vunpack.c.l.b16 %v839
      %v851 = vunpack.c.h.b16 %v839
      %v852 = vunpack.c.l.b16 %v840
      %v853 = vunpack.c.h.b16 %v840
      %v854 = vunpack.c.l.b16 %v841
      %v855 = vunpack.c.h.b16 %v841
      %v856 = vunpack.c.l.b16 %v842
      %v857 = vpack.c.b16 %v848, %v848
      %v858 = vpack.c.b16 %v849, %v849
      %v859 = vpack.c.b16 %v850, %v850
      %v860 = vpack.c.b16 %v851, %v851
      %v861 = vpack.c.b16 %v852, %v852
      %v862 = vpack.c.b16 %v853, %v853
      %v863 = vpack.c.b16 %v854, %v854
      %v864 = vpack.c.b16 %v855, %v855
      %v865 = vpack.c.b16 %v856, %v856
      %875 = vst [vmem:[%s204] sm:$0xf] %v857
      %876 = vst [vmem:[%s204 + $0x4] sm:$0xf] %v858
      %877 = vst [vmem:[%s204 + $0x8] sm:$0xf] %v859
      %878 = vst [vmem:[%s204 + $0xc] sm:$0xf] %v860
      %879 = vst [vmem:[%s204 + $0x10] sm:$0xf] %v861
      %880 = vst [vmem:[%s204 + $0x14] sm:$0xf] %v862
      %881 = vst [vmem:[%s204 + $0x18] sm:$0xf] %v863
      %882 = vst [vmem:[%s204 + $0x1c] sm:$0xf] %v864
      %883 = vst [vmem:[%s204 + $0x20] sm:$0xf] %v865
      %v884 = vadd.f32 %v829, %v830
      %v885 = vadd.f32 %v884, %v831
      %v886 = vadd.f32 %v885, %v832
      %v887 = vadd.f32 %v886, %v833
      %v888 = vadd.f32 %v887, %v834
      %v889 = vadd.f32 %v888, %v835
      %v890 = vadd.f32 %v889, %v836
      %v891 = vadd.f32 %v890, %v837
      %v892 = vrot.slane %v891, 4
      %v893 = vadd.f32 %v891, %v892
      %v894 = vrot.slane %v893, 2
      %v895 = vadd.f32 %v893, %v894
      %v896 = vrot.slane %v895, 1
      %v897 = vadd.f32 %v895, %v896
      %898 = vst [vmem:[%s208] sm:$0x1] %v897
      %v899 = vmul.f32 %v829, %v829
      %v900 = vmul.f32 %v830, %v830
      %v901 = vmul.f32 %v831, %v831
      %v902 = vmul.f32 %v832, %v832
      %v903 = vmul.f32 %v833, %v833
      %v904 = vmul.f32 %v834, %v834
      %v905 = vmul.f32 %v835, %v835
      %v906 = vmul.f32 %v836, %v836
      %v907 = vmul.f32 %v837, %v837
      %v908 = vadd.f32 %v899, %v900
      %v909 = vadd.f32 %v908, %v901
      %v910 = vadd.f32 %v909, %v902
      %v911 = vadd.f32 %v910, %v903
      %v912 = vadd.f32 %v911, %v904
      %v913 = vadd.f32 %v912, %v905
      %v914 = vadd.f32 %v913, %v906
      %v915 = vadd.f32 %v914, %v907
      %v916 = vrot.slane %v915, 4
      %v917 = vadd.f32 %v915, %v916
      %v918 = vrot.slane %v917, 2
      %v919 = vadd.f32 %v917, %v918
      %v920 = vrot.slane %v919, 1
      %v921 = vadd.f32 %v919, %v920
      %922 = vst [vmem:[%s208 + $0x1] sm:$0x1] %v921
      %p923 = scmp.lt.s32.totalorder %s16, 1
      %s924 = scalar_select %p923, %s16, 1
      %s925 = smul.addr %s924, 9
      %s926 = smul.addr %s925, 4
      %s927 = scalar_lea.vmem %s3, %s926
      %p928 = scmp.lt.s32.totalorder %s16, 1
      %s929 = scalar_select %p928, %s16, 1
      %s930 = smul.addr %s929, 2
      %s931 = scalar_lea.vmem %s4, %s930
      // Predicated region
      $region33: #{downsample.2} parent=31 // pred_check
        %p932 = pneg %p102
      $region34: #{downsample.2} parent=31 // pred_check_branch
        %934 = sbr.rel (%p932) target = $region36
      $region35: #{downsample.2} parent=31 // pred_region
        _
      $region36: #{downsample.2} parent=31 // pred_fallthru
        _
      // Predicated region
      $region37: #{downsample.2} parent=31 // pred_check
        %p935 = pneg %p128
      $region38: #{downsample.2} parent=31 // pred_check_branch
        %937 = sbr.rel (%p935) target = $region40
      $region39: #{downsample.2} parent=31 // pred_region
        _
      $region40: #{downsample.2} parent=31 // pred_fallthru
        _
    $region32: #{downsample.2} parent=5 // pred_fallthru
      _
    %p938 = scmp.le.s32.totalorder 2, %s11
    // Predicated region
    $region41: #{downsample.2} parent=5 // pred_check
      %p939 = pneg %p938
    $region42: #{downsample.2} parent=5 // pred_check_branch
      %941 = sbr.rel (%p939) target = $region44
    $region43: #{downsample.2} parent=5 // pred_region
      %s942 = ssub.s32 %s11, 2
      // Predicated region
      $region45: #{downsample.2} parent=43 // pred_check
        %p943 = pneg %p108
      $region46: #{downsample.2} parent=43 // pred_check_branch
        %945 = sbr.rel (%p943) target = $region48
      $region47: #{downsample.2} parent=43 // pred_region
        %p946 = scmp.lt.s32.totalorder %s17, 1
        %s947 = scalar_select %p946, %s17, 1
        %s948 = smul.addr %s947, 9
        %s949 = smul.addr %s948, 4
        %s950 = scalar_lea.vmem %s3, %s949
      $region48: #{downsample.2} parent=43 // pred_fallthru
        _
      // Predicated region
      $region49: #{downsample.2} parent=43 // pred_check
        %p951 = pneg %p134
      $region50: #{downsample.2} parent=43 // pred_check_branch
        %953 = sbr.rel (%p951) target = $region52
      $region51: #{downsample.2} parent=43 // pred_region
        %p954 = scmp.lt.s32.totalorder %s17, 1
        %s955 = scalar_select %p954, %s17, 1
        %s956 = smul.addr %s955, 2
        %s957 = scalar_lea.vmem %s4, %s956
      $region52: #{downsample.2} parent=43 // pred_fallthru
        _
    $region44: #{downsample.2} parent=5 // pred_fallthru
      _
  $region6: #{downsample.2} parent=0 // loop_footer
    %s15 = sadd.s32 1, %s11
  $region7: #{downsample.2} parent=0 // loop_footer_branch
    %10 = sbr.rel target = $region3
  $region8: #{downsample.2} parent=0 // loop_exit
    _

</llo_original>
